<compile_context>
chip_gen: v7x
topology: tpu7x:2x2x1
jax: 0.10.0
libtpu: 0.0.40
codegen_flags: <defaults>
</compile_context>

<pallas_src>
import jax
import jax.numpy as jnp
from jax import lax
from jax.experimental import pallas as pl
from jax.experimental.pallas import tpu as pltpu

BN_EPS = 1e-5
K = 7          # conv kernel size
PAD = 3        # (K - 1) // 2


# ---------------- Pallas kernels ----------------

def _compress_conv7x7_kernel(w_ref, x_ref, conv_ref, pad_ref):
    """Per-image: channel max/mean compress + 7x7 'same' conv (2 -> 1 chan).

    w_ref   : (98,) f32 in SMEM, layout [cin, ky, kx] flattened
    x_ref   : (1, C, H, W) f32 block (one image)
    conv_ref: (1, 1, H, W) f32 block (pre-BN conv output; bias omitted, it is
              cancelled by the train-mode BatchNorm mean subtraction)
    pad_ref : (2, H+6, W+6) f32 VMEM scratch (zero-padded compressed map)
    """
    _, C, H, W = x_ref.shape

    # Channel max & mean ("compress") -- running VPU max/add over C slices.
    cmax = x_ref[0, 0]
    csum = x_ref[0, 0]
    for c in range(1, C):
        xc = x_ref[0, c]
        cmax = jnp.maximum(cmax, xc)
        csum = csum + xc
    cmean = csum * (1.0 / C)

    # Zero-padded staging buffer for the 7x7 'same' conv (padding = 3).
    pad_ref[...] = jnp.zeros_like(pad_ref)
    pad_ref[0, PAD:PAD + H, PAD:PAD + W] = cmax
    pad_ref[1, PAD:PAD + H, PAD:PAD + W] = cmean

    # 7x7 cross-correlation over the 2 compressed channels:
    # 98 scalar-weight FMAs over (H, W) tiles (taps read straight from the
    # padded VMEM scratch -- never materialized in HBM).
    acc = jnp.zeros((H, W), jnp.float32)
    for c in range(2):
        for ky in range(K):
            for kx in range(K):
                wv = w_ref[c * (K * K) + ky * K + kx]
                acc = acc + wv * pad_ref[c, ky:ky + H, kx:kx + W]

    conv_ref[0, 0] = acc


def _bn_sigmoid_kernel(ss_ref, conv_ref, o_ref):
    """Apply folded BatchNorm scale/shift then sigmoid.

    ss_ref  : (2,) f32 SMEM -> [scale, shift] with
              scale = gamma * rsqrt(var + eps), shift = beta - mean * scale
    conv_ref: (1, 1, H, W) f32 block
    o_ref   : (1, 1, H, W) f32 block
    """
    a = ss_ref[0]
    b = ss_ref[1]
    z = conv_ref[...] * a + b
    o_ref[...] = 1.0 / (1.0 + jnp.exp(-z))


# ---------------- wrappers ----------------

def compress_conv7x7(x, w_flat):
    """x: (N, C, H, W) f32, w_flat: (98,) f32 -> (N, 1, H, W) f32 (pre-BN)."""
    N, C, H, W = x.shape
    flops = N * (2 * C * H * W + 2 * 2 * K * K * H * W)
    bytes_accessed = (x.size + N * H * W + w_flat.size) * 4
    return pl.pallas_call(
        _compress_conv7x7_kernel,
        out_shape=jax.ShapeDtypeStruct((N, 1, H, W), jnp.float32),
        grid=(N,),
        in_specs=[
            pl.BlockSpec(memory_space=pltpu.MemorySpace.SMEM),      # weights
            pl.BlockSpec((1, C, H, W), lambda n: (n, 0, 0, 0)),     # one image
        ],
        out_specs=pl.BlockSpec((1, 1, H, W), lambda n: (n, 0, 0, 0)),
        scratch_shapes=[pltpu.VMEM((2, H + 2 * PAD, W + 2 * PAD), jnp.float32)],
        compiler_params=pltpu.CompilerParams(dimension_semantics=("parallel",)),
        cost_estimate=pl.CostEstimate(flops=flops, transcendentals=0,
                                      bytes_accessed=bytes_accessed),
    )(w_flat, x)


def bn_sigmoid(conv, scale_shift):
    """conv: (N, 1, H, W) f32, scale_shift: (2,) f32 -> (N, 1, H, W) f32."""
    N, _, H, W = conv.shape
    return pl.pallas_call(
        _bn_sigmoid_kernel,
        out_shape=jax.ShapeDtypeStruct((N, 1, H, W), jnp.float32),
        grid=(N,),
        in_specs=[
            pl.BlockSpec(memory_space=pltpu.MemorySpace.SMEM),      # scale/shift
            pl.BlockSpec((1, 1, H, W), lambda n: (n, 0, 0, 0)),
        ],
        out_specs=pl.BlockSpec((1, 1, H, W), lambda n: (n, 0, 0, 0)),
        compiler_params=pltpu.CompilerParams(dimension_semantics=("parallel",)),
        cost_estimate=pl.CostEstimate(flops=2 * N * H * W,
                                      transcendentals=N * H * W,
                                      bytes_accessed=8 * N * H * W + 8),
    )(scale_shift, conv)


# ---------------- parameters & full forward ----------------

def init_params(key):
    k1, k2, k3, k4 = jax.random.split(key, 4)
    w = jax.random.normal(k1, (2, K, K), jnp.float32) * (2.0 / (2 * K * K)) ** 0.5
    return dict(
        w=w.reshape(2 * K * K),                                   # (98,)
        # Conv bias kept for parity with nn.Conv2d, but it is exactly
        # cancelled by the train-mode BatchNorm mean subtraction, so the
        # kernel never adds it (perf-review suggestion).
        b=0.02 * jax.random.normal(k2, (), jnp.float32),
        gamma=1.0 + 0.05 * jax.random.normal(k3, (), jnp.float32),  # BN weight
        beta=0.05 * jax.random.normal(k4, (), jnp.float32),         # BN bias
    )


def spatial_gate_forward(params, x_nchw):
    x = x_nchw.astype(jnp.float32)
    conv = compress_conv7x7(x, params["w"])                    # (N,1,H,W)
    # Train-mode BatchNorm2d(1): per-batch stats over all N*H*W positions,
    # biased variance, eps = 1e-5.  Finalized here in plain jnp (tiny), then
    # folded into a single scale/shift for the normalization kernel.
    mean = jnp.mean(conv)
    var = jnp.mean(jnp.square(conv - mean))
    scale = params["gamma"] * lax.rsqrt(var + BN_EPS)
    shift = params["beta"] - mean * scale
    scale_shift = jnp.stack([scale, shift]).astype(jnp.float32)  # (2,)
    return bn_sigmoid(conv, scale_shift)                         # (N,1,H,W)


# ---------------- pure-JAX reference (for in-script verification) ----------------

def reference_forward(params, x_nchw):
    x = x_nchw.astype(jnp.float32)
    cmax = jnp.max(x, axis=1, keepdims=True)
    cmean = jnp.mean(x, axis=1, keepdims=True)
    comp = jnp.concatenate([cmax, cmean], axis=1)               # (N,2,H,W)
    w = params["w"].reshape(1, 2, K, K)                          # (O,I,KH,KW)
    conv = lax.conv_general_dilated(
        comp, w, window_strides=(1, 1), padding=((PAD, PAD), (PAD, PAD)),
        dimension_numbers=("NCHW", "OIHW", "NCHW"))
    conv = conv + params["b"]
    mean = jnp.mean(conv)
    var = jnp.mean(jnp.square(conv - mean))
    y = (conv - mean) * lax.rsqrt(var + BN_EPS) * params["gamma"] + params["beta"]
    return jax.nn.sigmoid(y)


if __name__ == "__main__":
    key = jax.random.PRNGKey(0)
    pkey, xkey = jax.random.split(key)
    params = init_params(pkey)
    x = jax.random.normal(xkey, (2, 4, 16, 16), jnp.float32)    # NCHW, like PyTorch

    fwd = jax.jit(spatial_gate_forward)
    out = jax.block_until_ready(fwd(params, x))

    assert out.shape == (2, 1, 16, 16), out.shape
    assert bool(jnp.all(jnp.isfinite(out)))
    assert bool(jnp.all((out >= 0.0) & (out <= 1.0)))

    ref = jax.block_until_ready(jax.jit(reference_forward)(params, x))
    assert bool(jnp.allclose(out, ref, atol=2e-5, rtol=1e-5)), (
        float(jnp.max(jnp.abs(out - ref))))

    print("KERNEL_OK")
</pallas_src>

<mosaic_0001>
module attributes {stable_mosaic.version = 11 : i64} {
  func.func @_bn_sigmoid_kernel(%arg0: i32, %arg1: memref<2xf32, #tpu.memory_space<smem>>, %arg2: memref<1x1x16x16xf32, #tpu.memory_space<vmem>>, %arg3: memref<1x1x16x16xf32, #tpu.memory_space<vmem>>) attributes {dimension_semantics = [#tpu.dimension_semantics<parallel>], iteration_bounds = array<i64: 2>, scalar_prefetch = 0 : i64, scratch_operands = 0 : i64, tpu.core_type = #tpu.core_type<tc>, window_params = [{transform_indices = @transform_0, window_bounds = array<i64: 2>}, {transform_indices = @transform_1, window_bounds = array<i64: 1, 1, 16, 16>}, {transform_indices = @transform_2, window_bounds = array<i64: 1, 1, 16, 16>}]} {
    %c0 = arith.constant 0 : index
    %0 = memref.load %arg1[%c0] : memref<2xf32, #tpu.memory_space<smem>>
    %c1 = arith.constant 1 : index
    %1 = memref.load %arg1[%c1] : memref<2xf32, #tpu.memory_space<smem>>
    %c0_0 = arith.constant 0 : index
    %c0_1 = arith.constant 0 : index
    %c0_2 = arith.constant 0 : index
    %c0_3 = arith.constant 0 : index
    %2 = vector.load %arg2[%c0_0, %c0_1, %c0_2, %c0_3] : memref<1x1x16x16xf32, #tpu.memory_space<vmem>>, vector<1x1x16x16xf32>
    %3 = vector.broadcast %0 : f32 to vector<1x1x16x16xf32>
    %4 = arith.mulf %2, %3 : vector<1x1x16x16xf32>
    %5 = vector.broadcast %1 : f32 to vector<1x1x16x16xf32>
    %6 = arith.addf %4, %5 : vector<1x1x16x16xf32>
    %cst = arith.constant 0.000000e+00 : f32
    %7 = vector.broadcast %cst : f32 to vector<1x1x16x16xf32>
    %8 = arith.subf %7, %6 : vector<1x1x16x16xf32>
    %9 = math.exp %8 : vector<1x1x16x16xf32>
    %cst_4 = arith.constant 1.000000e+00 : f32
    %10 = vector.broadcast %cst_4 : f32 to vector<1x1x16x16xf32>
    %11 = arith.addf %10, %9 : vector<1x1x16x16xf32>
    %cst_5 = arith.constant 1.000000e+00 : f32
    %12 = vector.broadcast %cst_5 : f32 to vector<1x1x16x16xf32>
    %13 = arith.divf %12, %11 : vector<1x1x16x16xf32>
    %c0_6 = arith.constant 0 : index
    %c0_7 = arith.constant 0 : index
    %c0_8 = arith.constant 0 : index
    %c0_9 = arith.constant 0 : index
    %14 = vector.load %arg3[%c0_6, %c0_7, %c0_8, %c0_9] : memref<1x1x16x16xf32, #tpu.memory_space<vmem>>, vector<1x1x16x16xf32>
    tpu.vector_store %arg3[%c0_6, %c0_7, %c0_8, %c0_9], %13 {strides = array<i32>} : memref<1x1x16x16xf32, #tpu.memory_space<vmem>>, vector<1x1x16x16xf32>,
    return
  }
  func.func @transform_0(%arg0: i32) -> i32 {
    %c0_i32 = arith.constant 0 : i32
    %c0_i32_0 = arith.constant 0 : i32
    return %c0_i32 : i32
  }
  func.func @transform_1(%arg0: i32) -> (i32, i32, i32, i32) {
    %c0_i32 = arith.constant 0 : i32
    %c0_i32_0 = arith.constant 0 : i32
    %c0_i32_1 = arith.constant 0 : i32
    %c0_i32_2 = arith.constant 0 : i32
    return %arg0, %c0_i32, %c0_i32_0, %c0_i32_1 : i32, i32, i32, i32
  }
  func.func @transform_2(%arg0: i32) -> (i32, i32, i32, i32) {
    %c0_i32 = arith.constant 0 : i32
    %c0_i32_0 = arith.constant 0 : i32
    %c0_i32_1 = arith.constant 0 : i32
    %c0_i32_2 = arith.constant 0 : i32
    return %arg0, %c0_i32, %c0_i32_0, %c0_i32_1 : i32, i32, i32, i32
  }
}

module attributes {stable_mosaic.version = 11 : i64} {
  func.func @_compress_conv7x7_kernel(%arg0: i32, %arg1: memref<98xf32, #tpu.memory_space<smem>>, %arg2: memref<1x4x16x16xf32, #tpu.memory_space<vmem>>, %arg3: memref<1x1x16x16xf32, #tpu.memory_space<vmem>>, %arg4: memref<2x22x22xf32, #tpu.memory_space<vmem>>) attributes {dimension_semantics = [#tpu.dimension_semantics<parallel>], iteration_bounds = array<i64: 2>, scalar_prefetch = 0 : i64, scratch_operands = 1 : i64, tpu.core_type = #tpu.core_type<tc>, window_params = [{transform_indices = @transform_0, window_bounds = array<i64: 98>}, {transform_indices = @transform_1, window_bounds = array<i64: 1, 4, 16, 16>}, {transform_indices = @transform_2, window_bounds = array<i64: 1, 1, 16, 16>}]} {
    %c0 = arith.constant 0 : index
    %c0_0 = arith.constant 0 : index
    %c0_1 = arith.constant 0 : index
    %c0_2 = arith.constant 0 : index
    %0 = vector.load %arg2[%c0, %c0_0, %c0_1, %c0_2] : memref<1x4x16x16xf32, #tpu.memory_space<vmem>>, vector<1x1x16x16xf32>
    %1 = vector.shape_cast %0 : vector<1x1x16x16xf32> to vector<16x16xf32>
    %c0_3 = arith.constant 0 : index
    %c0_4 = arith.constant 0 : index
    %c0_5 = arith.constant 0 : index
    %c0_6 = arith.constant 0 : index
    %2 = vector.load %arg2[%c0_3, %c0_4, %c0_5, %c0_6] : memref<1x4x16x16xf32, #tpu.memory_space<vmem>>, vector<1x1x16x16xf32>
    %3 = vector.shape_cast %2 : vector<1x1x16x16xf32> to vector<16x16xf32>
    %c0_7 = arith.constant 0 : index
    %c1 = arith.constant 1 : index
    %c0_8 = arith.constant 0 : index
    %c0_9 = arith.constant 0 : index
    %4 = vector.load %arg2[%c0_7, %c1, %c0_8, %c0_9] : memref<1x4x16x16xf32, #tpu.memory_space<vmem>>, vector<1x1x16x16xf32>
    %5 = vector.shape_cast %4 : vector<1x1x16x16xf32> to vector<16x16xf32>
    %6 = arith.maximumf %1, %5 : vector<16x16xf32>
    %7 = arith.addf %3, %5 : vector<16x16xf32>
    %c0_10 = arith.constant 0 : index
    %c2 = arith.constant 2 : index
    %c0_11 = arith.constant 0 : index
    %c0_12 = arith.constant 0 : index
    %8 = vector.load %arg2[%c0_10, %c2, %c0_11, %c0_12] : memref<1x4x16x16xf32, #tpu.memory_space<vmem>>, vector<1x1x16x16xf32>
    %9 = vector.shape_cast %8 : vector<1x1x16x16xf32> to vector<16x16xf32>
    %10 = arith.maximumf %6, %9 : vector<16x16xf32>
    %11 = arith.addf %7, %9 : vector<16x16xf32>
    %c0_13 = arith.constant 0 : index
    %c3 = arith.constant 3 : index
    %c0_14 = arith.constant 0 : index
    %c0_15 = arith.constant 0 : index
    %12 = vector.load %arg2[%c0_13, %c3, %c0_14, %c0_15] : memref<1x4x16x16xf32, #tpu.memory_space<vmem>>, vector<1x1x16x16xf32>
    %13 = vector.shape_cast %12 : vector<1x1x16x16xf32> to vector<16x16xf32>
    %14 = arith.maximumf %10, %13 : vector<16x16xf32>
    %15 = arith.addf %11, %13 : vector<16x16xf32>
    %cst = arith.constant 2.500000e-01 : f32
    %16 = vector.broadcast %cst : f32 to vector<16x16xf32>
    %17 = arith.mulf %15, %16 : vector<16x16xf32>
    %cst_16 = arith.constant 0.000000e+00 : f32
    %18 = vector.broadcast %cst_16 : f32 to vector<2x22x22xf32>
    %c0_17 = arith.constant 0 : index
    %c0_18 = arith.constant 0 : index
    %c0_19 = arith.constant 0 : index
    %19 = vector.load %arg4[%c0_17, %c0_18, %c0_19] : memref<2x22x22xf32, #tpu.memory_space<vmem>>, vector<2x22x22xf32>
    tpu.vector_store %arg4[%c0_17, %c0_18, %c0_19], %18 {strides = array<i32>} : memref<2x22x22xf32, #tpu.memory_space<vmem>>, vector<2x22x22xf32>,
    %c0_20 = arith.constant 0 : index
    %c3_21 = arith.constant 3 : index
    %c3_22 = arith.constant 3 : index
    %20 = vector.load %arg4[%c0_20, %c3_21, %c3_22] : memref<2x22x22xf32, #tpu.memory_space<vmem>>, vector<1x16x16xf32>
    %21 = vector.shape_cast %20 : vector<1x16x16xf32> to vector<16x16xf32>
    %22 = vector.shape_cast %14 : vector<16x16xf32> to vector<1x16x16xf32>
    tpu.vector_store %arg4[%c0_20, %c3_21, %c3_22], %22 {strides = array<i32>} : memref<2x22x22xf32, #tpu.memory_space<vmem>>, vector<1x16x16xf32>,
    %c1_23 = arith.constant 1 : index
    %c3_24 = arith.constant 3 : index
    %c3_25 = arith.constant 3 : index
    %23 = vector.load %arg4[%c1_23, %c3_24, %c3_25] : memref<2x22x22xf32, #tpu.memory_space<vmem>>, vector<1x16x16xf32>
    %24 = vector.shape_cast %23 : vector<1x16x16xf32> to vector<16x16xf32>
    %25 = vector.shape_cast %17 : vector<16x16xf32> to vector<1x16x16xf32>
    tpu.vector_store %arg4[%c1_23, %c3_24, %c3_25], %25 {strides = array<i32>} : memref<2x22x22xf32, #tpu.memory_space<vmem>>, vector<1x16x16xf32>,
    %cst_26 = arith.constant 0.000000e+00 : f32
    %26 = vector.broadcast %cst_26 : f32 to vector<16x16xf32>
    %c0_27 = arith.constant 0 : index
    %27 = memref.load %arg1[%c0_27] : memref<98xf32, #tpu.memory_space<smem>>
    %c0_28 = arith.constant 0 : index
    %c0_29 = arith.constant 0 : index
    %c0_30 = arith.constant 0 : index
    %28 = vector.load %arg4[%c0_28, %c0_29, %c0_30] : memref<2x22x22xf32, #tpu.memory_space<vmem>>, vector<1x16x16xf32>
    %29 = vector.shape_cast %28 : vector<1x16x16xf32> to vector<16x16xf32>
    %30 = vector.broadcast %27 : f32 to vector<16x16xf32>
    %31 = arith.mulf %30, %29 : vector<16x16xf32>
    %32 = arith.addf %26, %31 : vector<16x16xf32>
    %c1_31 = arith.constant 1 : index
    %33 = memref.load %arg1[%c1_31] : memref<98xf32, #tpu.memory_space<smem>>
    %c0_32 = arith.constant 0 : index
    %c0_33 = arith.constant 0 : index
    %c1_34 = arith.constant 1 : index
    %34 = vector.load %arg4[%c0_32, %c0_33, %c1_34] : memref<2x22x22xf32, #tpu.memory_space<vmem>>, vector<1x16x16xf32>
    %35 = vector.shape_cast %34 : vector<1x16x16xf32> to vector<16x16xf32>
    %36 = vector.broadcast %33 : f32 to vector<16x16xf32>
    %37 = arith.mulf %36, %35 : vector<16x16xf32>
    %38 = arith.addf %32, %37 : vector<16x16xf32>
    %c2_35 = arith.constant 2 : index
    %39 = memref.load %arg1[%c2_35] : memref<98xf32, #tpu.memory_space<smem>>
    %c0_36 = arith.constant 0 : index
    %c0_37 = arith.constant 0 : index
    %c2_38 = arith.constant 2 : index
    %40 = vector.load %arg4[%c0_36, %c0_37, %c2_38] : memref<2x22x22xf32, #tpu.memory_space<vmem>>, vector<1x16x16xf32>
    %41 = vector.shape_cast %40 : vector<1x16x16xf32> to vector<16x16xf32>
    %42 = vector.broadcast %39 : f32 to vector<16x16xf32>
    %43 = arith.mulf %42, %41 : vector<16x16xf32>
    %44 = arith.addf %38, %43 : vector<16x16xf32>
    %c3_39 = arith.constant 3 : index
    %45 = memref.load %arg1[%c3_39] : memref<98xf32, #tpu.memory_space<smem>>
    %c0_40 = arith.constant 0 : index
    %c0_41 = arith.constant 0 : index
    %c3_42 = arith.constant 3 : index
    %46 = vector.load %arg4[%c0_40, %c0_41, %c3_42] : memref<2x22x22xf32, #tpu.memory_space<vmem>>, vector<1x16x16xf32>
    %47 = vector.shape_cast %46 : vector<1x16x16xf32> to vector<16x16xf32>
    %48 = vector.broadcast %45 : f32 to vector<16x16xf32>
    %49 = arith.mulf %48, %47 : vector<16x16xf32>
    %50 = arith.addf %44, %49 : vector<16x16xf32>
    %c4 = arith.constant 4 : index
    %51 = memref.load %arg1[%c4] : memref<98xf32, #tpu.memory_space<smem>>
    %c0_43 = arith.constant 0 : index
    %c0_44 = arith.constant 0 : index
    %c4_45 = arith.constant 4 : index
    %52 = vector.load %arg4[%c0_43, %c0_44, %c4_45] : memref<2x22x22xf32, #tpu.memory_space<vmem>>, vector<1x16x16xf32>
    %53 = vector.shape_cast %52 : vector<1x16x16xf32> to vector<16x16xf32>
    %54 = vector.broadcast %51 : f32 to vector<16x16xf32>
    %55 = arith.mulf %54, %53 : vector<16x16xf32>
    %56 = arith.addf %50, %55 : vector<16x16xf32>
    %c5 = arith.constant 5 : index
    %57 = memref.load %arg1[%c5] : memref<98xf32, #tpu.memory_space<smem>>
    %c0_46 = arith.constant 0 : index
    %c0_47 = arith.constant 0 : index
    %c5_48 = arith.constant 5 : index
    %58 = vector.load %arg4[%c0_46, %c0_47, %c5_48] : memref<2x22x22xf32, #tpu.memory_space<vmem>>, vector<1x16x16xf32>
    %59 = vector.shape_cast %58 : vector<1x16x16xf32> to vector<16x16xf32>
    %60 = vector.broadcast %57 : f32 to vector<16x16xf32>
    %61 = arith.mulf %60, %59 : vector<16x16xf32>
    %62 = arith.addf %56, %61 : vector<16x16xf32>
    %c6 = arith.constant 6 : index
    %63 = memref.load %arg1[%c6] : memref<98xf32, #tpu.memory_space<smem>>
    %c0_49 = arith.constant 0 : index
    %c0_50 = arith.constant 0 : index
    %c6_51 = arith.constant 6 : index
    %64 = vector.load %arg4[%c0_49, %c0_50, %c6_51] : memref<2x22x22xf32, #tpu.memory_space<vmem>>, vector<1x16x16xf32>
    %65 = vector.shape_cast %64 : vector<1x16x16xf32> to vector<16x16xf32>
    %66 = vector.broadcast %63 : f32 to vector<16x16xf32>
    %67 = arith.mulf %66, %65 : vector<16x16xf32>
    %68 = arith.addf %62, %67 : vector<16x16xf32>
    %c7 = arith.constant 7 : index
    %69 = memref.load %arg1[%c7] : memref<98xf32, #tpu.memory_space<smem>>
    %c0_52 = arith.constant 0 : index
    %c1_53 = arith.constant 1 : index
    %c0_54 = arith.constant 0 : index
    %70 = vector.load %arg4[%c0_52, %c1_53, %c0_54] : memref<2x22x22xf32, #tpu.memory_space<vmem>>, vector<1x16x16xf32>
    %71 = vector.shape_cast %70 : vector<1x16x16xf32> to vector<16x16xf32>
    %72 = vector.broadcast %69 : f32 to vector<16x16xf32>
    %73 = arith.mulf %72, %71 : vector<16x16xf32>
    %74 = arith.addf %68, %73 : vector<16x16xf32>
    %c8 = arith.constant 8 : index
    %75 = memref.load %arg1[%c8] : memref<98xf32, #tpu.memory_space<smem>>
    %c0_55 = arith.constant 0 : index
    %c1_56 = arith.constant 1 : index
    %c1_57 = arith.constant 1 : index
    %76 = vector.load %arg4[%c0_55, %c1_56, %c1_57] : memref<2x22x22xf32, #tpu.memory_space<vmem>>, vector<1x16x16xf32>
    %77 = vector.shape_cast %76 : vector<1x16x16xf32> to vector<16x16xf32>
    %78 = vector.broadcast %75 : f32 to vector<16x16xf32>
    %79 = arith.mulf %78, %77 : vector<16x16xf32>
    %80 = arith.addf %74, %79 : vector<16x16xf32>
    %c9 = arith.constant 9 : index
    %81 = memref.load %arg1[%c9] : memref<98xf32, #tpu.memory_space<smem>>
    %c0_58 = arith.constant 0 : index
    %c1_59 = arith.constant 1 : index
    %c2_60 = arith.constant 2 : index
    %82 = vector.load %arg4[%c0_58, %c1_59, %c2_60] : memref<2x22x22xf32, #tpu.memory_space<vmem>>, vector<1x16x16xf32>
    %83 = vector.shape_cast %82 : vector<1x16x16xf32> to vector<16x16xf32>
    %84 = vector.broadcast %81 : f32 to vector<16x16xf32>
    %85 = arith.mulf %84, %83 : vector<16x16xf32>
    %86 = arith.addf %80, %85 : vector<16x16xf32>
    %c10 = arith.constant 10 : index
    %87 = memref.load %arg1[%c10] : memref<98xf32, #tpu.memory_space<smem>>
    %c0_61 = arith.constant 0 : index
    %c1_62 = arith.constant 1 : index
    %c3_63 = arith.constant 3 : index
    %88 = vector.load %arg4[%c0_61, %c1_62, %c3_63] : memref<2x22x22xf32, #tpu.memory_space<vmem>>, vector<1x16x16xf32>
    %89 = vector.shape_cast %88 : vector<1x16x16xf32> to vector<16x16xf32>
    %90 = vector.broadcast %87 : f32 to vector<16x16xf32>
    %91 = arith.mulf %90, %89 : vector<16x16xf32>
    %92 = arith.addf %86, %91 : vector<16x16xf32>
    %c11 = arith.constant 11 : index
    %93 = memref.load %arg1[%c11] : memref<98xf32, #tpu.memory_space<smem>>
    %c0_64 = arith.constant 0 : index
    %c1_65 = arith.constant 1 : index
    %c4_66 = arith.constant 4 : index
    %94 = vector.load %arg4[%c0_64, %c1_65, %c4_66] : memref<2x22x22xf32, #tpu.memory_space<vmem>>, vector<1x16x16xf32>
    %95 = vector.shape_cast %94 : vector<1x16x16xf32> to vector<16x16xf32>
    %96 = vector.broadcast %93 : f32 to vector<16x16xf32>
    %97 = arith.mulf %96, %95 : vector<16x16xf32>
    %98 = arith.addf %92, %97 : vector<16x16xf32>
    %c12 = arith.constant 12 : index
    %99 = memref.load %arg1[%c12] : memref<98xf32, #tpu.memory_space<smem>>
    %c0_67 = arith.constant 0 : index
    %c1_68 = arith.constant 1 : index
    %c5_69 = arith.constant 5 : index
    %100 = vector.load %arg4[%c0_67, %c1_68, %c5_69] : memref<2x22x22xf32, #tpu.memory_space<vmem>>, vector<1x16x16xf32>
    %101 = vector.shape_cast %100 : vector<1x16x16xf32> to vector<16x16xf32>
    %102 = vector.broadcast %99 : f32 to vector<16x16xf32>
    %103 = arith.mulf %102, %101 : vector<16x16xf32>
    %104 = arith.addf %98, %103 : vector<16x16xf32>
    %c13 = arith.constant 13 : index
    %105 = memref.load %arg1[%c13] : memref<98xf32, #tpu.memory_space<smem>>
    %c0_70 = arith.constant 0 : index
    %c1_71 = arith.constant 1 : index
    %c6_72 = arith.constant 6 : index
    %106 = vector.load %arg4[%c0_70, %c1_71, %c6_72] : memref<2x22x22xf32, #tpu.memory_space<vmem>>, vector<1x16x16xf32>
    %107 = vector.shape_cast %106 : vector<1x16x16xf32> to vector<16x16xf32>
    %108 = vector.broadcast %105 : f32 to vector<16x16xf32>
    %109 = arith.mulf %108, %107 : vector<16x16xf32>
    %110 = arith.addf %104, %109 : vector<16x16xf32>
    %c14 = arith.constant 14 : index
    %111 = memref.load %arg1[%c14] : memref<98xf32, #tpu.memory_space<smem>>
    %c0_73 = arith.constant 0 : index
    %c2_74 = arith.constant 2 : index
    %c0_75 = arith.constant 0 : index
    %112 = vector.load %arg4[%c0_73, %c2_74, %c0_75] : memref<2x22x22xf32, #tpu.memory_space<vmem>>, vector<1x16x16xf32>
    %113 = vector.shape_cast %112 : vector<1x16x16xf32> to vector<16x16xf32>
    %114 = vector.broadcast %111 : f32 to vector<16x16xf32>
    %115 = arith.mulf %114, %113 : vector<16x16xf32>
    %116 = arith.addf %110, %115 : vector<16x16xf32>
    %c15 = arith.constant 15 : index
    %117 = memref.load %arg1[%c15] : memref<98xf32, #tpu.memory_space<smem>>
    %c0_76 = arith.constant 0 : index
    %c2_77 = arith.constant 2 : index
    %c1_78 = arith.constant 1 : index
    %118 = vector.load %arg4[%c0_76, %c2_77, %c1_78] : memref<2x22x22xf32, #tpu.memory_space<vmem>>, vector<1x16x16xf32>
    %119 = vector.shape_cast %118 : vector<1x16x16xf32> to vector<16x16xf32>
    %120 = vector.broadcast %117 : f32 to vector<16x16xf32>
    %121 = arith.mulf %120, %119 : vector<16x16xf32>
    %122 = arith.addf %116, %121 : vector<16x16xf32>
    %c16 = arith.constant 16 : index
    %123 = memref.load %arg1[%c16] : memref<98xf32, #tpu.memory_space<smem>>
    %c0_79 = arith.constant 0 : index
    %c2_80 = arith.constant 2 : index
    %c2_81 = arith.constant 2 : index
    %124 = vector.load %arg4[%c0_79, %c2_80, %c2_81] : memref<2x22x22xf32, #tpu.memory_space<vmem>>, vector<1x16x16xf32>
    %125 = vector.shape_cast %124 : vector<1x16x16xf32> to vector<16x16xf32>
    %126 = vector.broadcast %123 : f32 to vector<16x16xf32>
    %127 = arith.mulf %126, %125 : vector<16x16xf32>
    %128 = arith.addf %122, %127 : vector<16x16xf32>
    %c17 = arith.constant 17 : index
    %129 = memref.load %arg1[%c17] : memref<98xf32, #tpu.memory_space<smem>>
    %c0_82 = arith.constant 0 : index
    %c2_83 = arith.constant 2 : index
    %c3_84 = arith.constant 3 : index
    %130 = vector.load %arg4[%c0_82, %c2_83, %c3_84] : memref<2x22x22xf32, #tpu.memory_space<vmem>>, vector<1x16x16xf32>
    %131 = vector.shape_cast %130 : vector<1x16x16xf32> to vector<16x16xf32>
    %132 = vector.broadcast %129 : f32 to vector<16x16xf32>
    %133 = arith.mulf %132, %131 : vector<16x16xf32>
    %134 = arith.addf %128, %133 : vector<16x16xf32>
    %c18 = arith.constant 18 : index
    %135 = memref.load %arg1[%c18] : memref<98xf32, #tpu.memory_space<smem>>
    %c0_85 = arith.constant 0 : index
    %c2_86 = arith.constant 2 : index
    %c4_87 = arith.constant 4 : index
    %136 = vector.load %arg4[%c0_85, %c2_86, %c4_87] : memref<2x22x22xf32, #tpu.memory_space<vmem>>, vector<1x16x16xf32>
    %137 = vector.shape_cast %136 : vector<1x16x16xf32> to vector<16x16xf32>
    %138 = vector.broadcast %135 : f32 to vector<16x16xf32>
    %139 = arith.mulf %138, %137 : vector<16x16xf32>
    %140 = arith.addf %134, %139 : vector<16x16xf32>
    %c19 = arith.constant 19 : index
    %141 = memref.load %arg1[%c19] : memref<98xf32, #tpu.memory_space<smem>>
    %c0_88 = arith.constant 0 : index
    %c2_89 = arith.constant 2 : index
    %c5_90 = arith.constant 5 : index
    %142 = vector.load %arg4[%c0_88, %c2_89, %c5_90] : memref<2x22x22xf32, #tpu.memory_space<vmem>>, vector<1x16x16xf32>
    %143 = vector.shape_cast %142 : vector<1x16x16xf32> to vector<16x16xf32>
    %144 = vector.broadcast %141 : f32 to vector<16x16xf32>
    %145 = arith.mulf %144, %143 : vector<16x16xf32>
    %146 = arith.addf %140, %145 : vector<16x16xf32>
    %c20 = arith.constant 20 : index
    %147 = memref.load %arg1[%c20] : memref<98xf32, #tpu.memory_space<smem>>
    %c0_91 = arith.constant 0 : index
    %c2_92 = arith.constant 2 : index
    %c6_93 = arith.constant 6 : index
    %148 = vector.load %arg4[%c0_91, %c2_92, %c6_93] : memref<2x22x22xf32, #tpu.memory_space<vmem>>, vector<1x16x16xf32>
    %149 = vector.shape_cast %148 : vector<1x16x16xf32> to vector<16x16xf32>
    %150 = vector.broadcast %147 : f32 to vector<16x16xf32>
    %151 = arith.mulf %150, %149 : vector<16x16xf32>
    %152 = arith.addf %146, %151 : vector<16x16xf32>
    %c21 = arith.constant 21 : index
    %153 = memref.load %arg1[%c21] : memref<98xf32, #tpu.memory_space<smem>>
    %c0_94 = arith.constant 0 : index
    %c3_95 = arith.constant 3 : index
    %c0_96 = arith.constant 0 : index
    %154 = vector.load %arg4[%c0_94, %c3_95, %c0_96] : memref<2x22x22xf32, #tpu.memory_space<vmem>>, vector<1x16x16xf32>
    %155 = vector.shape_cast %154 : vector<1x16x16xf32> to vector<16x16xf32>
    %156 = vector.broadcast %153 : f32 to vector<16x16xf32>
    %157 = arith.mulf %156, %155 : vector<16x16xf32>
    %158 = arith.addf %152, %157 : vector<16x16xf32>
    %c22 = arith.constant 22 : index
    %159 = memref.load %arg1[%c22] : memref<98xf32, #tpu.memory_space<smem>>
    %c0_97 = arith.constant 0 : index
    %c3_98 = arith.constant 3 : index
    %c1_99 = arith.constant 1 : index
    %160 = vector.load %arg4[%c0_97, %c3_98, %c1_99] : memref<2x22x22xf32, #tpu.memory_space<vmem>>, vector<1x16x16xf32>
    %161 = vector.shape_cast %160 : vector<1x16x16xf32> to vector<16x16xf32>
    %162 = vector.broadcast %159 : f32 to vector<16x16xf32>
    %163 = arith.mulf %162, %161 : vector<16x16xf32>
    %164 = arith.addf %158, %163 : vector<16x16xf32>
    %c23 = arith.constant 23 : index
    %165 = memref.load %arg1[%c23] : memref<98xf32, #tpu.memory_space<smem>>
    %c0_100 = arith.constant 0 : index
    %c3_101 = arith.constant 3 : index
    %c2_102 = arith.constant 2 : index
    %166 = vector.load %arg4[%c0_100, %c3_101, %c2_102] : memref<2x22x22xf32, #tpu.memory_space<vmem>>, vector<1x16x16xf32>
    %167 = vector.shape_cast %166 : vector<1x16x16xf32> to vector<16x16xf32>
    %168 = vector.broadcast %165 : f32 to vector<16x16xf32>
    %169 = arith.mulf %168, %167 : vector<16x16xf32>
    %170 = arith.addf %164, %169 : vector<16x16xf32>
    %c24 = arith.constant 24 : index
    %171 = memref.load %arg1[%c24] : memref<98xf32, #tpu.memory_space<smem>>
    %c0_103 = arith.constant 0 : index
    %c3_104 = arith.constant 3 : index
    %c3_105 = arith.constant 3 : index
    %172 = vector.load %arg4[%c0_103, %c3_104, %c3_105] : memref<2x22x22xf32, #tpu.memory_space<vmem>>, vector<1x16x16xf32>
    %173 = vector.shape_cast %172 : vector<1x16x16xf32> to vector<16x16xf32>
    %174 = vector.broadcast %171 : f32 to vector<16x16xf32>
    %175 = arith.mulf %174, %173 : vector<16x16xf32>
    %176 = arith.addf %170, %175 : vector<16x16xf32>
    %c25 = arith.constant 25 : index
    %177 = memref.load %arg1[%c25] : memref<98xf32, #tpu.memory_space<smem>>
    %c0_106 = arith.constant 0 : index
    %c3_107 = arith.constant 3 : index
    %c4_108 = arith.constant 4 : index
    %178 = vector.load %arg4[%c0_106, %c3_107, %c4_108] : memref<2x22x22xf32, #tpu.memory_space<vmem>>, vector<1x16x16xf32>
    %179 = vector.shape_cast %178 : vector<1x16x16xf32> to vector<16x16xf32>
    %180 = vector.broadcast %177 : f32 to vector<16x16xf32>
    %181 = arith.mulf %180, %179 : vector<16x16xf32>
    %182 = arith.addf %176, %181 : vector<16x16xf32>
    %c26 = arith.constant 26 : index
    %183 = memref.load %arg1[%c26] : memref<98xf32, #tpu.memory_space<smem>>
    %c0_109 = arith.constant 0 : index
    %c3_110 = arith.constant 3 : index
    %c5_111 = arith.constant 5 : index
    %184 = vector.load %arg4[%c0_109, %c3_110, %c5_111] : memref<2x22x22xf32, #tpu.memory_space<vmem>>, vector<1x16x16xf32>
    %185 = vector.shape_cast %184 : vector<1x16x16xf32> to vector<16x16xf32>
    %186 = vector.broadcast %183 : f32 to vector<16x16xf32>
    %187 = arith.mulf %186, %185 : vector<16x16xf32>
    %188 = arith.addf %182, %187 : vector<16x16xf32>
    %c27 = arith.constant 27 : index
    %189 = memref.load %arg1[%c27] : memref<98xf32, #tpu.memory_space<smem>>
    %c0_112 = arith.constant 0 : index
    %c3_113 = arith.constant 3 : index
    %c6_114 = arith.constant 6 : index
    %190 = vector.load %arg4[%c0_112, %c3_113, %c6_114] : memref<2x22x22xf32, #tpu.memory_space<vmem>>, vector<1x16x16xf32>
    %191 = vector.shape_cast %190 : vector<1x16x16xf32> to vector<16x16xf32>
    %192 = vector.broadcast %189 : f32 to vector<16x16xf32>
    %193 = arith.mulf %192, %191 : vector<16x16xf32>
    %194 = arith.addf %188, %193 : vector<16x16xf32>
    %c28 = arith.constant 28 : index
    %195 = memref.load %arg1[%c28] : memref<98xf32, #tpu.memory_space<smem>>
    %c0_115 = arith.constant 0 : index
    %c4_116 = arith.constant 4 : index
    %c0_117 = arith.constant 0 : index
    %196 = vector.load %arg4[%c0_115, %c4_116, %c0_117] : memref<2x22x22xf32, #tpu.memory_space<vmem>>, vector<1x16x16xf32>
    %197 = vector.shape_cast %196 : vector<1x16x16xf32> to vector<16x16xf32>
    %198 = vector.broadcast %195 : f32 to vector<16x16xf32>
    %199 = arith.mulf %198, %197 : vector<16x16xf32>
    %200 = arith.addf %194, %199 : vector<16x16xf32>
    %c29 = arith.constant 29 : index
    %201 = memref.load %arg1[%c29] : memref<98xf32, #tpu.memory_space<smem>>
    %c0_118 = arith.constant 0 : index
    %c4_119 = arith.constant 4 : index
    %c1_120 = arith.constant 1 : index
    %202 = vector.load %arg4[%c0_118, %c4_119, %c1_120] : memref<2x22x22xf32, #tpu.memory_space<vmem>>, vector<1x16x16xf32>
    %203 = vector.shape_cast %202 : vector<1x16x16xf32> to vector<16x16xf32>
    %204 = vector.broadcast %201 : f32 to vector<16x16xf32>
    %205 = arith.mulf %204, %203 : vector<16x16xf32>
    %206 = arith.addf %200, %205 : vector<16x16xf32>
    %c30 = arith.constant 30 : index
    %207 = memref.load %arg1[%c30] : memref<98xf32, #tpu.memory_space<smem>>
    %c0_121 = arith.constant 0 : index
    %c4_122 = arith.constant 4 : index
    %c2_123 = arith.constant 2 : index
    %208 = vector.load %arg4[%c0_121, %c4_122, %c2_123] : memref<2x22x22xf32, #tpu.memory_space<vmem>>, vector<1x16x16xf32>
    %209 = vector.shape_cast %208 : vector<1x16x16xf32> to vector<16x16xf32>
    %210 = vector.broadcast %207 : f32 to vector<16x16xf32>
    %211 = arith.mulf %210, %209 : vector<16x16xf32>
    %212 = arith.addf %206, %211 : vector<16x16xf32>
    %c31 = arith.constant 31 : index
    %213 = memref.load %arg1[%c31] : memref<98xf32, #tpu.memory_space<smem>>
    %c0_124 = arith.constant 0 : index
    %c4_125 = arith.constant 4 : index
    %c3_126 = arith.constant 3 : index
    %214 = vector.load %arg4[%c0_124, %c4_125, %c3_126] : memref<2x22x22xf32, #tpu.memory_space<vmem>>, vector<1x16x16xf32>
    %215 = vector.shape_cast %214 : vector<1x16x16xf32> to vector<16x16xf32>
    %216 = vector.broadcast %213 : f32 to vector<16x16xf32>
    %217 = arith.mulf %216, %215 : vector<16x16xf32>
    %218 = arith.addf %212, %217 : vector<16x16xf32>
    %c32 = arith.constant 32 : index
    %219 = memref.load %arg1[%c32] : memref<98xf32, #tpu.memory_space<smem>>
    %c0_127 = arith.constant 0 : index
    %c4_128 = arith.constant 4 : index
    %c4_129 = arith.constant 4 : index
    %220 = vector.load %arg4[%c0_127, %c4_128, %c4_129] : memref<2x22x22xf32, #tpu.memory_space<vmem>>, vector<1x16x16xf32>
    %221 = vector.shape_cast %220 : vector<1x16x16xf32> to vector<16x16xf32>
    %222 = vector.broadcast %219 : f32 to vector<16x16xf32>
    %223 = arith.mulf %222, %221 : vector<16x16xf32>
    %224 = arith.addf %218, %223 : vector<16x16xf32>
    %c33 = arith.constant 33 : index
    %225 = memref.load %arg1[%c33] : memref<98xf32, #tpu.memory_space<smem>>
    %c0_130 = arith.constant 0 : index
    %c4_131 = arith.constant 4 : index
    %c5_132 = arith.constant 5 : index
    %226 = vector.load %arg4[%c0_130, %c4_131, %c5_132] : memref<2x22x22xf32, #tpu.memory_space<vmem>>, vector<1x16x16xf32>
    %227 = vector.shape_cast %226 : vector<1x16x16xf32> to vector<16x16xf32>
    %228 = vector.broadcast %225 : f32 to vector<16x16xf32>
    %229 = arith.mulf %228, %227 : vector<16x16xf32>
    %230 = arith.addf %224, %229 : vector<16x16xf32>
    %c34 = arith.constant 34 : index
    %231 = memref.load %arg1[%c34] : memref<98xf32, #tpu.memory_space<smem>>
    %c0_133 = arith.constant 0 : index
    %c4_134 = arith.constant 4 : index
    %c6_135 = arith.constant 6 : index
    %232 = vector.load %arg4[%c0_133, %c4_134, %c6_135] : memref<2x22x22xf32, #tpu.memory_space<vmem>>, vector<1x16x16xf32>
    %233 = vector.shape_cast %232 : vector<1x16x16xf32> to vector<16x16xf32>
    %234 = vector.broadcast %231 : f32 to vector<16x16xf32>
    %235 = arith.mulf %234, %233 : vector<16x16xf32>
    %236 = arith.addf %230, %235 : vector<16x16xf32>
    %c35 = arith.constant 35 : index
    %237 = memref.load %arg1[%c35] : memref<98xf32, #tpu.memory_space<smem>>
    %c0_136 = arith.constant 0 : index
    %c5_137 = arith.constant 5 : index
    %c0_138 = arith.constant 0 : index
    %238 = vector.load %arg4[%c0_136, %c5_137, %c0_138] : memref<2x22x22xf32, #tpu.memory_space<vmem>>, vector<1x16x16xf32>
    %239 = vector.shape_cast %238 : vector<1x16x16xf32> to vector<16x16xf32>
    %240 = vector.broadcast %237 : f32 to vector<16x16xf32>
    %241 = arith.mulf %240, %239 : vector<16x16xf32>
    %242 = arith.addf %236, %241 : vector<16x16xf32>
    %c36 = arith.constant 36 : index
    %243 = memref.load %arg1[%c36] : memref<98xf32, #tpu.memory_space<smem>>
    %c0_139 = arith.constant 0 : index
    %c5_140 = arith.constant 5 : index
    %c1_141 = arith.constant 1 : index
    %244 = vector.load %arg4[%c0_139, %c5_140, %c1_141] : memref<2x22x22xf32, #tpu.memory_space<vmem>>, vector<1x16x16xf32>
    %245 = vector.shape_cast %244 : vector<1x16x16xf32> to vector<16x16xf32>
    %246 = vector.broadcast %243 : f32 to vector<16x16xf32>
    %247 = arith.mulf %246, %245 : vector<16x16xf32>
    %248 = arith.addf %242, %247 : vector<16x16xf32>
    %c37 = arith.constant 37 : index
    %249 = memref.load %arg1[%c37] : memref<98xf32, #tpu.memory_space<smem>>
    %c0_142 = arith.constant 0 : index
    %c5_143 = arith.constant 5 : index
    %c2_144 = arith.constant 2 : index
    %250 = vector.load %arg4[%c0_142, %c5_143, %c2_144] : memref<2x22x22xf32, #tpu.memory_space<vmem>>, vector<1x16x16xf32>
    %251 = vector.shape_cast %250 : vector<1x16x16xf32> to vector<16x16xf32>
    %252 = vector.broadcast %249 : f32 to vector<16x16xf32>
    %253 = arith.mulf %252, %251 : vector<16x16xf32>
    %254 = arith.addf %248, %253 : vector<16x16xf32>
    %c38 = arith.constant 38 : index
    %255 = memref.load %arg1[%c38] : memref<98xf32, #tpu.memory_space<smem>>
    %c0_145 = arith.constant 0 : index
    %c5_146 = arith.constant 5 : index
    %c3_147 = arith.constant 3 : index
    %256 = vector.load %arg4[%c0_145, %c5_146, %c3_147] : memref<2x22x22xf32, #tpu.memory_space<vmem>>, vector<1x16x16xf32>
    %257 = vector.shape_cast %256 : vector<1x16x16xf32> to vector<16x16xf32>
    %258 = vector.broadcast %255 : f32 to vector<16x16xf32>
    %259 = arith.mulf %258, %257 : vector<16x16xf32>
    %260 = arith.addf %254, %259 : vector<16x16xf32>
    %c39 = arith.constant 39 : index
    %261 = memref.load %arg1[%c39] : memref<98xf32, #tpu.memory_space<smem>>
    %c0_148 = arith.constant 0 : index
    %c5_149 = arith.constant 5 : index
    %c4_150 = arith.constant 4 : index
    %262 = vector.load %arg4[%c0_148, %c5_149, %c4_150] : memref<2x22x22xf32, #tpu.memory_space<vmem>>, vector<1x16x16xf32>
    %263 = vector.shape_cast %262 : vector<1x16x16xf32> to vector<16x16xf32>
    %264 = vector.broadcast %261 : f32 to vector<16x16xf32>
    %265 = arith.mulf %264, %263 : vector<16x16xf32>
    %266 = arith.addf %260, %265 : vector<16x16xf32>
    %c40 = arith.constant 40 : index
    %267 = memref.load %arg1[%c40] : memref<98xf32, #tpu.memory_space<smem>>
    %c0_151 = arith.constant 0 : index
    %c5_152 = arith.constant 5 : index
    %c5_153 = arith.constant 5 : index
    %268 = vector.load %arg4[%c0_151, %c5_152, %c5_153] : memref<2x22x22xf32, #tpu.memory_space<vmem>>, vector<1x16x16xf32>
    %269 = vector.shape_cast %268 : vector<1x16x16xf32> to vector<16x16xf32>
    %270 = vector.broadcast %267 : f32 to vector<16x16xf32>
    %271 = arith.mulf %270, %269 : vector<16x16xf32>
    %272 = arith.addf %266, %271 : vector<16x16xf32>
    %c41 = arith.constant 41 : index
    %273 = memref.load %arg1[%c41] : memref<98xf32, #tpu.memory_space<smem>>
    %c0_154 = arith.constant 0 : index
    %c5_155 = arith.constant 5 : index
    %c6_156 = arith.constant 6 : index
    %274 = vector.load %arg4[%c0_154, %c5_155, %c6_156] : memref<2x22x22xf32, #tpu.memory_space<vmem>>, vector<1x16x16xf32>
    %275 = vector.shape_cast %274 : vector<1x16x16xf32> to vector<16x16xf32>
    %276 = vector.broadcast %273 : f32 to vector<16x16xf32>
    %277 = arith.mulf %276, %275 : vector<16x16xf32>
    %278 = arith.addf %272, %277 : vector<16x16xf32>
    %c42 = arith.constant 42 : index
    %279 = memref.load %arg1[%c42] : memref<98xf32, #tpu.memory_space<smem>>
    %c0_157 = arith.constant 0 : index
    %c6_158 = arith.constant 6 : index
    %c0_159 = arith.constant 0 : index
    %280 = vector.load %arg4[%c0_157, %c6_158, %c0_159] : memref<2x22x22xf32, #tpu.memory_space<vmem>>, vector<1x16x16xf32>
    %281 = vector.shape_cast %280 : vector<1x16x16xf32> to vector<16x16xf32>
    %282 = vector.broadcast %279 : f32 to vector<16x16xf32>
    %283 = arith.mulf %282, %281 : vector<16x16xf32>
    %284 = arith.addf %278, %283 : vector<16x16xf32>
    %c43 = arith.constant 43 : index
    %285 = memref.load %arg1[%c43] : memref<98xf32, #tpu.memory_space<smem>>
    %c0_160 = arith.constant 0 : index
    %c6_161 = arith.constant 6 : index
    %c1_162 = arith.constant 1 : index
    %286 = vector.load %arg4[%c0_160, %c6_161, %c1_162] : memref<2x22x22xf32, #tpu.memory_space<vmem>>, vector<1x16x16xf32>
    %287 = vector.shape_cast %286 : vector<1x16x16xf32> to vector<16x16xf32>
    %288 = vector.broadcast %285 : f32 to vector<16x16xf32>
    %289 = arith.mulf %288, %287 : vector<16x16xf32>
    %290 = arith.addf %284, %289 : vector<16x16xf32>
    %c44 = arith.constant 44 : index
    %291 = memref.load %arg1[%c44] : memref<98xf32, #tpu.memory_space<smem>>
    %c0_163 = arith.constant 0 : index
    %c6_164 = arith.constant 6 : index
    %c2_165 = arith.constant 2 : index
    %292 = vector.load %arg4[%c0_163, %c6_164, %c2_165] : memref<2x22x22xf32, #tpu.memory_space<vmem>>, vector<1x16x16xf32>
    %293 = vector.shape_cast %292 : vector<1x16x16xf32> to vector<16x16xf32>
    %294 = vector.broadcast %291 : f32 to vector<16x16xf32>
    %295 = arith.mulf %294, %293 : vector<16x16xf32>
    %296 = arith.addf %290, %295 : vector<16x16xf32>
    %c45 = arith.constant 45 : index
    %297 = memref.load %arg1[%c45] : memref<98xf32, #tpu.memory_space<smem>>
    %c0_166 = arith.constant 0 : index
    %c6_167 = arith.constant 6 : index
    %c3_168 = arith.constant 3 : index
    %298 = vector.load %arg4[%c0_166, %c6_167, %c3_168] : memref<2x22x22xf32, #tpu.memory_space<vmem>>, vector<1x16x16xf32>
    %299 = vector.shape_cast %298 : vector<1x16x16xf32> to vector<16x16xf32>
    %300 = vector.broadcast %297 : f32 to vector<16x16xf32>
    %301 = arith.mulf %300, %299 : vector<16x16xf32>
    %302 = arith.addf %296, %301 : vector<16x16xf32>
    %c46 = arith.constant 46 : index
    %303 = memref.load %arg1[%c46] : memref<98xf32, #tpu.memory_space<smem>>
    %c0_169 = arith.constant 0 : index
    %c6_170 = arith.constant 6 : index
    %c4_171 = arith.constant 4 : index
    %304 = vector.load %arg4[%c0_169, %c6_170, %c4_171] : memref<2x22x22xf32, #tpu.memory_space<vmem>>, vector<1x16x16xf32>
    %305 = vector.shape_cast %304 : vector<1x16x16xf32> to vector<16x16xf32>
    %306 = vector.broadcast %303 : f32 to vector<16x16xf32>
    %307 = arith.mulf %306, %305 : vector<16x16xf32>
    %308 = arith.addf %302, %307 : vector<16x16xf32>
    %c47 = arith.constant 47 : index
    %309 = memref.load %arg1[%c47] : memref<98xf32, #tpu.memory_space<smem>>
    %c0_172 = arith.constant 0 : index
    %c6_173 = arith.constant 6 : index
    %c5_174 = arith.constant 5 : index
    %310 = vector.load %arg4[%c0_172, %c6_173, %c5_174] : memref<2x22x22xf32, #tpu.memory_space<vmem>>, vector<1x16x16xf32>
    %311 = vector.shape_cast %310 : vector<1x16x16xf32> to vector<16x16xf32>
    %312 = vector.broadcast %309 : f32 to vector<16x16xf32>
    %313 = arith.mulf %312, %311 : vector<16x16xf32>
    %314 = arith.addf %308, %313 : vector<16x16xf32>
    %c48 = arith.constant 48 : index
    %315 = memref.load %arg1[%c48] : memref<98xf32, #tpu.memory_space<smem>>
    %c0_175 = arith.constant 0 : index
    %c6_176 = arith.constant 6 : index
    %c6_177 = arith.constant 6 : index
    %316 = vector.load %arg4[%c0_175, %c6_176, %c6_177] : memref<2x22x22xf32, #tpu.memory_space<vmem>>, vector<1x16x16xf32>
    %317 = vector.shape_cast %316 : vector<1x16x16xf32> to vector<16x16xf32>
    %318 = vector.broadcast %315 : f32 to vector<16x16xf32>
    %319 = arith.mulf %318, %317 : vector<16x16xf32>
    %320 = arith.addf %314, %319 : vector<16x16xf32>
    %c49 = arith.constant 49 : index
    %321 = memref.load %arg1[%c49] : memref<98xf32, #tpu.memory_space<smem>>
    %c1_178 = arith.constant 1 : index
    %c0_179 = arith.constant 0 : index
    %c0_180 = arith.constant 0 : index
    %322 = vector.load %arg4[%c1_178, %c0_179, %c0_180] : memref<2x22x22xf32, #tpu.memory_space<vmem>>, vector<1x16x16xf32>
    %323 = vector.shape_cast %322 : vector<1x16x16xf32> to vector<16x16xf32>
    %324 = vector.broadcast %321 : f32 to vector<16x16xf32>
    %325 = arith.mulf %324, %323 : vector<16x16xf32>
    %326 = arith.addf %320, %325 : vector<16x16xf32>
    %c50 = arith.constant 50 : index
    %327 = memref.load %arg1[%c50] : memref<98xf32, #tpu.memory_space<smem>>
    %c1_181 = arith.constant 1 : index
    %c0_182 = arith.constant 0 : index
    %c1_183 = arith.constant 1 : index
    %328 = vector.load %arg4[%c1_181, %c0_182, %c1_183] : memref<2x22x22xf32, #tpu.memory_space<vmem>>, vector<1x16x16xf32>
    %329 = vector.shape_cast %328 : vector<1x16x16xf32> to vector<16x16xf32>
    %330 = vector.broadcast %327 : f32 to vector<16x16xf32>
    %331 = arith.mulf %330, %329 : vector<16x16xf32>
    %332 = arith.addf %326, %331 : vector<16x16xf32>
    %c51 = arith.constant 51 : index
    %333 = memref.load %arg1[%c51] : memref<98xf32, #tpu.memory_space<smem>>
    %c1_184 = arith.constant 1 : index
    %c0_185 = arith.constant 0 : index
    %c2_186 = arith.constant 2 : index
    %334 = vector.load %arg4[%c1_184, %c0_185, %c2_186] : memref<2x22x22xf32, #tpu.memory_space<vmem>>, vector<1x16x16xf32>
    %335 = vector.shape_cast %334 : vector<1x16x16xf32> to vector<16x16xf32>
    %336 = vector.broadcast %333 : f32 to vector<16x16xf32>
    %337 = arith.mulf %336, %335 : vector<16x16xf32>
    %338 = arith.addf %332, %337 : vector<16x16xf32>
    %c52 = arith.constant 52 : index
    %339 = memref.load %arg1[%c52] : memref<98xf32, #tpu.memory_space<smem>>
    %c1_187 = arith.constant 1 : index
    %c0_188 = arith.constant 0 : index
    %c3_189 = arith.constant 3 : index
    %340 = vector.load %arg4[%c1_187, %c0_188, %c3_189] : memref<2x22x22xf32, #tpu.memory_space<vmem>>, vector<1x16x16xf32>
    %341 = vector.shape_cast %340 : vector<1x16x16xf32> to vector<16x16xf32>
    %342 = vector.broadcast %339 : f32 to vector<16x16xf32>
    %343 = arith.mulf %342, %341 : vector<16x16xf32>
    %344 = arith.addf %338, %343 : vector<16x16xf32>
    %c53 = arith.constant 53 : index
    %345 = memref.load %arg1[%c53] : memref<98xf32, #tpu.memory_space<smem>>
    %c1_190 = arith.constant 1 : index
    %c0_191 = arith.constant 0 : index
    %c4_192 = arith.constant 4 : index
    %346 = vector.load %arg4[%c1_190, %c0_191, %c4_192] : memref<2x22x22xf32, #tpu.memory_space<vmem>>, vector<1x16x16xf32>
    %347 = vector.shape_cast %346 : vector<1x16x16xf32> to vector<16x16xf32>
    %348 = vector.broadcast %345 : f32 to vector<16x16xf32>
    %349 = arith.mulf %348, %347 : vector<16x16xf32>
    %350 = arith.addf %344, %349 : vector<16x16xf32>
    %c54 = arith.constant 54 : index
    %351 = memref.load %arg1[%c54] : memref<98xf32, #tpu.memory_space<smem>>
    %c1_193 = arith.constant 1 : index
    %c0_194 = arith.constant 0 : index
    %c5_195 = arith.constant 5 : index
    %352 = vector.load %arg4[%c1_193, %c0_194, %c5_195] : memref<2x22x22xf32, #tpu.memory_space<vmem>>, vector<1x16x16xf32>
    %353 = vector.shape_cast %352 : vector<1x16x16xf32> to vector<16x16xf32>
    %354 = vector.broadcast %351 : f32 to vector<16x16xf32>
    %355 = arith.mulf %354, %353 : vector<16x16xf32>
    %356 = arith.addf %350, %355 : vector<16x16xf32>
    %c55 = arith.constant 55 : index
    %357 = memref.load %arg1[%c55] : memref<98xf32, #tpu.memory_space<smem>>
    %c1_196 = arith.constant 1 : index
    %c0_197 = arith.constant 0 : index
    %c6_198 = arith.constant 6 : index
    %358 = vector.load %arg4[%c1_196, %c0_197, %c6_198] : memref<2x22x22xf32, #tpu.memory_space<vmem>>, vector<1x16x16xf32>
    %359 = vector.shape_cast %358 : vector<1x16x16xf32> to vector<16x16xf32>
    %360 = vector.broadcast %357 : f32 to vector<16x16xf32>
    %361 = arith.mulf %360, %359 : vector<16x16xf32>
    %362 = arith.addf %356, %361 : vector<16x16xf32>
    %c56 = arith.constant 56 : index
    %363 = memref.load %arg1[%c56] : memref<98xf32, #tpu.memory_space<smem>>
    %c1_199 = arith.constant 1 : index
    %c1_200 = arith.constant 1 : index
    %c0_201 = arith.constant 0 : index
    %364 = vector.load %arg4[%c1_199, %c1_200, %c0_201] : memref<2x22x22xf32, #tpu.memory_space<vmem>>, vector<1x16x16xf32>
    %365 = vector.shape_cast %364 : vector<1x16x16xf32> to vector<16x16xf32>
    %366 = vector.broadcast %363 : f32 to vector<16x16xf32>
    %367 = arith.mulf %366, %365 : vector<16x16xf32>
    %368 = arith.addf %362, %367 : vector<16x16xf32>
    %c57 = arith.constant 57 : index
    %369 = memref.load %arg1[%c57] : memref<98xf32, #tpu.memory_space<smem>>
    %c1_202 = arith.constant 1 : index
    %c1_203 = arith.constant 1 : index
    %c1_204 = arith.constant 1 : index
    %370 = vector.load %arg4[%c1_202, %c1_203, %c1_204] : memref<2x22x22xf32, #tpu.memory_space<vmem>>, vector<1x16x16xf32>
    %371 = vector.shape_cast %370 : vector<1x16x16xf32> to vector<16x16xf32>
    %372 = vector.broadcast %369 : f32 to vector<16x16xf32>
    %373 = arith.mulf %372, %371 : vector<16x16xf32>
    %374 = arith.addf %368, %373 : vector<16x16xf32>
    %c58 = arith.constant 58 : index
    %375 = memref.load %arg1[%c58] : memref<98xf32, #tpu.memory_space<smem>>
    %c1_205 = arith.constant 1 : index
    %c1_206 = arith.constant 1 : index
    %c2_207 = arith.constant 2 : index
    %376 = vector.load %arg4[%c1_205, %c1_206, %c2_207] : memref<2x22x22xf32, #tpu.memory_space<vmem>>, vector<1x16x16xf32>
    %377 = vector.shape_cast %376 : vector<1x16x16xf32> to vector<16x16xf32>
    %378 = vector.broadcast %375 : f32 to vector<16x16xf32>
    %379 = arith.mulf %378, %377 : vector<16x16xf32>
    %380 = arith.addf %374, %379 : vector<16x16xf32>
    %c59 = arith.constant 59 : index
    %381 = memref.load %arg1[%c59] : memref<98xf32, #tpu.memory_space<smem>>
    %c1_208 = arith.constant 1 : index
    %c1_209 = arith.constant 1 : index
    %c3_210 = arith.constant 3 : index
    %382 = vector.load %arg4[%c1_208, %c1_209, %c3_210] : memref<2x22x22xf32, #tpu.memory_space<vmem>>, vector<1x16x16xf32>
    %383 = vector.shape_cast %382 : vector<1x16x16xf32> to vector<16x16xf32>
    %384 = vector.broadcast %381 : f32 to vector<16x16xf32>
    %385 = arith.mulf %384, %383 : vector<16x16xf32>
    %386 = arith.addf %380, %385 : vector<16x16xf32>
    %c60 = arith.constant 60 : index
    %387 = memref.load %arg1[%c60] : memref<98xf32, #tpu.memory_space<smem>>
    %c1_211 = arith.constant 1 : index
    %c1_212 = arith.constant 1 : index
    %c4_213 = arith.constant 4 : index
    %388 = vector.load %arg4[%c1_211, %c1_212, %c4_213] : memref<2x22x22xf32, #tpu.memory_space<vmem>>, vector<1x16x16xf32>
    %389 = vector.shape_cast %388 : vector<1x16x16xf32> to vector<16x16xf32>
    %390 = vector.broadcast %387 : f32 to vector<16x16xf32>
    %391 = arith.mulf %390, %389 : vector<16x16xf32>
    %392 = arith.addf %386, %391 : vector<16x16xf32>
    %c61 = arith.constant 61 : index
    %393 = memref.load %arg1[%c61] : memref<98xf32, #tpu.memory_space<smem>>
    %c1_214 = arith.constant 1 : index
    %c1_215 = arith.constant 1 : index
    %c5_216 = arith.constant 5 : index
    %394 = vector.load %arg4[%c1_214, %c1_215, %c5_216] : memref<2x22x22xf32, #tpu.memory_space<vmem>>, vector<1x16x16xf32>
    %395 = vector.shape_cast %394 : vector<1x16x16xf32> to vector<16x16xf32>
    %396 = vector.broadcast %393 : f32 to vector<16x16xf32>
    %397 = arith.mulf %396, %395 : vector<16x16xf32>
    %398 = arith.addf %392, %397 : vector<16x16xf32>
    %c62 = arith.constant 62 : index
    %399 = memref.load %arg1[%c62] : memref<98xf32, #tpu.memory_space<smem>>
    %c1_217 = arith.constant 1 : index
    %c1_218 = arith.constant 1 : index
    %c6_219 = arith.constant 6 : index
    %400 = vector.load %arg4[%c1_217, %c1_218, %c6_219] : memref<2x22x22xf32, #tpu.memory_space<vmem>>, vector<1x16x16xf32>
    %401 = vector.shape_cast %400 : vector<1x16x16xf32> to vector<16x16xf32>
    %402 = vector.broadcast %399 : f32 to vector<16x16xf32>
    %403 = arith.mulf %402, %401 : vector<16x16xf32>
    %404 = arith.addf %398, %403 : vector<16x16xf32>
    %c63 = arith.constant 63 : index
    %405 = memref.load %arg1[%c63] : memref<98xf32, #tpu.memory_space<smem>>
    %c1_220 = arith.constant 1 : index
    %c2_221 = arith.constant 2 : index
    %c0_222 = arith.constant 0 : index
    %406 = vector.load %arg4[%c1_220, %c2_221, %c0_222] : memref<2x22x22xf32, #tpu.memory_space<vmem>>, vector<1x16x16xf32>
    %407 = vector.shape_cast %406 : vector<1x16x16xf32> to vector<16x16xf32>
    %408 = vector.broadcast %405 : f32 to vector<16x16xf32>
    %409 = arith.mulf %408, %407 : vector<16x16xf32>
    %410 = arith.addf %404, %409 : vector<16x16xf32>
    %c64 = arith.constant 64 : index
    %411 = memref.load %arg1[%c64] : memref<98xf32, #tpu.memory_space<smem>>
    %c1_223 = arith.constant 1 : index
    %c2_224 = arith.constant 2 : index
    %c1_225 = arith.constant 1 : index
    %412 = vector.load %arg4[%c1_223, %c2_224, %c1_225] : memref<2x22x22xf32, #tpu.memory_space<vmem>>, vector<1x16x16xf32>
    %413 = vector.shape_cast %412 : vector<1x16x16xf32> to vector<16x16xf32>
    %414 = vector.broadcast %411 : f32 to vector<16x16xf32>
    %415 = arith.mulf %414, %413 : vector<16x16xf32>
    %416 = arith.addf %410, %415 : vector<16x16xf32>
    %c65 = arith.constant 65 : index
    %417 = memref.load %arg1[%c65] : memref<98xf32, #tpu.memory_space<smem>>
    %c1_226 = arith.constant 1 : index
    %c2_227 = arith.constant 2 : index
    %c2_228 = arith.constant 2 : index
    %418 = vector.load %arg4[%c1_226, %c2_227, %c2_228] : memref<2x22x22xf32, #tpu.memory_space<vmem>>, vector<1x16x16xf32>
    %419 = vector.shape_cast %418 : vector<1x16x16xf32> to vector<16x16xf32>
    %420 = vector.broadcast %417 : f32 to vector<16x16xf32>
    %421 = arith.mulf %420, %419 : vector<16x16xf32>
    %422 = arith.addf %416, %421 : vector<16x16xf32>
    %c66 = arith.constant 66 : index
    %423 = memref.load %arg1[%c66] : memref<98xf32, #tpu.memory_space<smem>>
    %c1_229 = arith.constant 1 : index
    %c2_230 = arith.constant 2 : index
    %c3_231 = arith.constant 3 : index
    %424 = vector.load %arg4[%c1_229, %c2_230, %c3_231] : memref<2x22x22xf32, #tpu.memory_space<vmem>>, vector<1x16x16xf32>
    %425 = vector.shape_cast %424 : vector<1x16x16xf32> to vector<16x16xf32>
    %426 = vector.broadcast %423 : f32 to vector<16x16xf32>
    %427 = arith.mulf %426, %425 : vector<16x16xf32>
    %428 = arith.addf %422, %427 : vector<16x16xf32>
    %c67 = arith.constant 67 : index
    %429 = memref.load %arg1[%c67] : memref<98xf32, #tpu.memory_space<smem>>
    %c1_232 = arith.constant 1 : index
    %c2_233 = arith.constant 2 : index
    %c4_234 = arith.constant 4 : index
    %430 = vector.load %arg4[%c1_232, %c2_233, %c4_234] : memref<2x22x22xf32, #tpu.memory_space<vmem>>, vector<1x16x16xf32>
    %431 = vector.shape_cast %430 : vector<1x16x16xf32> to vector<16x16xf32>
    %432 = vector.broadcast %429 : f32 to vector<16x16xf32>
    %433 = arith.mulf %432, %431 : vector<16x16xf32>
    %434 = arith.addf %428, %433 : vector<16x16xf32>
    %c68 = arith.constant 68 : index
    %435 = memref.load %arg1[%c68] : memref<98xf32, #tpu.memory_space<smem>>
    %c1_235 = arith.constant 1 : index
    %c2_236 = arith.constant 2 : index
    %c5_237 = arith.constant 5 : index
    %436 = vector.load %arg4[%c1_235, %c2_236, %c5_237] : memref<2x22x22xf32, #tpu.memory_space<vmem>>, vector<1x16x16xf32>
    %437 = vector.shape_cast %436 : vector<1x16x16xf32> to vector<16x16xf32>
    %438 = vector.broadcast %435 : f32 to vector<16x16xf32>
    %439 = arith.mulf %438, %437 : vector<16x16xf32>
    %440 = arith.addf %434, %439 : vector<16x16xf32>
    %c69 = arith.constant 69 : index
    %441 = memref.load %arg1[%c69] : memref<98xf32, #tpu.memory_space<smem>>
    %c1_238 = arith.constant 1 : index
    %c2_239 = arith.constant 2 : index
    %c6_240 = arith.constant 6 : index
    %442 = vector.load %arg4[%c1_238, %c2_239, %c6_240] : memref<2x22x22xf32, #tpu.memory_space<vmem>>, vector<1x16x16xf32>
    %443 = vector.shape_cast %442 : vector<1x16x16xf32> to vector<16x16xf32>
    %444 = vector.broadcast %441 : f32 to vector<16x16xf32>
    %445 = arith.mulf %444, %443 : vector<16x16xf32>
    %446 = arith.addf %440, %445 : vector<16x16xf32>
    %c70 = arith.constant 70 : index
    %447 = memref.load %arg1[%c70] : memref<98xf32, #tpu.memory_space<smem>>
    %c1_241 = arith.constant 1 : index
    %c3_242 = arith.constant 3 : index
    %c0_243 = arith.constant 0 : index
    %448 = vector.load %arg4[%c1_241, %c3_242, %c0_243] : memref<2x22x22xf32, #tpu.memory_space<vmem>>, vector<1x16x16xf32>
    %449 = vector.shape_cast %448 : vector<1x16x16xf32> to vector<16x16xf32>
    %450 = vector.broadcast %447 : f32 to vector<16x16xf32>
    %451 = arith.mulf %450, %449 : vector<16x16xf32>
    %452 = arith.addf %446, %451 : vector<16x16xf32>
    %c71 = arith.constant 71 : index
    %453 = memref.load %arg1[%c71] : memref<98xf32, #tpu.memory_space<smem>>
    %c1_244 = arith.constant 1 : index
    %c3_245 = arith.constant 3 : index
    %c1_246 = arith.constant 1 : index
    %454 = vector.load %arg4[%c1_244, %c3_245, %c1_246] : memref<2x22x22xf32, #tpu.memory_space<vmem>>, vector<1x16x16xf32>
    %455 = vector.shape_cast %454 : vector<1x16x16xf32> to vector<16x16xf32>
    %456 = vector.broadcast %453 : f32 to vector<16x16xf32>
    %457 = arith.mulf %456, %455 : vector<16x16xf32>
    %458 = arith.addf %452, %457 : vector<16x16xf32>
    %c72 = arith.constant 72 : index
    %459 = memref.load %arg1[%c72] : memref<98xf32, #tpu.memory_space<smem>>
    %c1_247 = arith.constant 1 : index
    %c3_248 = arith.constant 3 : index
    %c2_249 = arith.constant 2 : index
    %460 = vector.load %arg4[%c1_247, %c3_248, %c2_249] : memref<2x22x22xf32, #tpu.memory_space<vmem>>, vector<1x16x16xf32>
    %461 = vector.shape_cast %460 : vector<1x16x16xf32> to vector<16x16xf32>
    %462 = vector.broadcast %459 : f32 to vector<16x16xf32>
    %463 = arith.mulf %462, %461 : vector<16x16xf32>
    %464 = arith.addf %458, %463 : vector<16x16xf32>
    %c73 = arith.constant 73 : index
    %465 = memref.load %arg1[%c73] : memref<98xf32, #tpu.memory_space<smem>>
    %c1_250 = arith.constant 1 : index
    %c3_251 = arith.constant 3 : index
    %c3_252 = arith.constant 3 : index
    %466 = vector.load %arg4[%c1_250, %c3_251, %c3_252] : memref<2x22x22xf32, #tpu.memory_space<vmem>>, vector<1x16x16xf32>
    %467 = vector.shape_cast %466 : vector<1x16x16xf32> to vector<16x16xf32>
    %468 = vector.broadcast %465 : f32 to vector<16x16xf32>
    %469 = arith.mulf %468, %467 : vector<16x16xf32>
    %470 = arith.addf %464, %469 : vector<16x16xf32>
    %c74 = arith.constant 74 : index
    %471 = memref.load %arg1[%c74] : memref<98xf32, #tpu.memory_space<smem>>
    %c1_253 = arith.constant 1 : index
    %c3_254 = arith.constant 3 : index
    %c4_255 = arith.constant 4 : index
    %472 = vector.load %arg4[%c1_253, %c3_254, %c4_255] : memref<2x22x22xf32, #tpu.memory_space<vmem>>, vector<1x16x16xf32>
    %473 = vector.shape_cast %472 : vector<1x16x16xf32> to vector<16x16xf32>
    %474 = vector.broadcast %471 : f32 to vector<16x16xf32>
    %475 = arith.mulf %474, %473 : vector<16x16xf32>
    %476 = arith.addf %470, %475 : vector<16x16xf32>
    %c75 = arith.constant 75 : index
    %477 = memref.load %arg1[%c75] : memref<98xf32, #tpu.memory_space<smem>>
    %c1_256 = arith.constant 1 : index
    %c3_257 = arith.constant 3 : index
    %c5_258 = arith.constant 5 : index
    %478 = vector.load %arg4[%c1_256, %c3_257, %c5_258] : memref<2x22x22xf32, #tpu.memory_space<vmem>>, vector<1x16x16xf32>
    %479 = vector.shape_cast %478 : vector<1x16x16xf32> to vector<16x16xf32>
    %480 = vector.broadcast %477 : f32 to vector<16x16xf32>
    %481 = arith.mulf %480, %479 : vector<16x16xf32>
    %482 = arith.addf %476, %481 : vector<16x16xf32>
    %c76 = arith.constant 76 : index
    %483 = memref.load %arg1[%c76] : memref<98xf32, #tpu.memory_space<smem>>
    %c1_259 = arith.constant 1 : index
    %c3_260 = arith.constant 3 : index
    %c6_261 = arith.constant 6 : index
    %484 = vector.load %arg4[%c1_259, %c3_260, %c6_261] : memref<2x22x22xf32, #tpu.memory_space<vmem>>, vector<1x16x16xf32>
    %485 = vector.shape_cast %484 : vector<1x16x16xf32> to vector<16x16xf32>
    %486 = vector.broadcast %483 : f32 to vector<16x16xf32>
    %487 = arith.mulf %486, %485 : vector<16x16xf32>
    %488 = arith.addf %482, %487 : vector<16x16xf32>
    %c77 = arith.constant 77 : index
    %489 = memref.load %arg1[%c77] : memref<98xf32, #tpu.memory_space<smem>>
    %c1_262 = arith.constant 1 : index
    %c4_263 = arith.constant 4 : index
    %c0_264 = arith.constant 0 : index
    %490 = vector.load %arg4[%c1_262, %c4_263, %c0_264] : memref<2x22x22xf32, #tpu.memory_space<vmem>>, vector<1x16x16xf32>
    %491 = vector.shape_cast %490 : vector<1x16x16xf32> to vector<16x16xf32>
    %492 = vector.broadcast %489 : f32 to vector<16x16xf32>
    %493 = arith.mulf %492, %491 : vector<16x16xf32>
    %494 = arith.addf %488, %493 : vector<16x16xf32>
    %c78 = arith.constant 78 : index
    %495 = memref.load %arg1[%c78] : memref<98xf32, #tpu.memory_space<smem>>
    %c1_265 = arith.constant 1 : index
    %c4_266 = arith.constant 4 : index
    %c1_267 = arith.constant 1 : index
    %496 = vector.load %arg4[%c1_265, %c4_266, %c1_267] : memref<2x22x22xf32, #tpu.memory_space<vmem>>, vector<1x16x16xf32>
    %497 = vector.shape_cast %496 : vector<1x16x16xf32> to vector<16x16xf32>
    %498 = vector.broadcast %495 : f32 to vector<16x16xf32>
    %499 = arith.mulf %498, %497 : vector<16x16xf32>
    %500 = arith.addf %494, %499 : vector<16x16xf32>
    %c79 = arith.constant 79 : index
    %501 = memref.load %arg1[%c79] : memref<98xf32, #tpu.memory_space<smem>>
    %c1_268 = arith.constant 1 : index
    %c4_269 = arith.constant 4 : index
    %c2_270 = arith.constant 2 : index
    %502 = vector.load %arg4[%c1_268, %c4_269, %c2_270] : memref<2x22x22xf32, #tpu.memory_space<vmem>>, vector<1x16x16xf32>
    %503 = vector.shape_cast %502 : vector<1x16x16xf32> to vector<16x16xf32>
    %504 = vector.broadcast %501 : f32 to vector<16x16xf32>
    %505 = arith.mulf %504, %503 : vector<16x16xf32>
    %506 = arith.addf %500, %505 : vector<16x16xf32>
    %c80 = arith.constant 80 : index
    %507 = memref.load %arg1[%c80] : memref<98xf32, #tpu.memory_space<smem>>
    %c1_271 = arith.constant 1 : index
    %c4_272 = arith.constant 4 : index
    %c3_273 = arith.constant 3 : index
    %508 = vector.load %arg4[%c1_271, %c4_272, %c3_273] : memref<2x22x22xf32, #tpu.memory_space<vmem>>, vector<1x16x16xf32>
    %509 = vector.shape_cast %508 : vector<1x16x16xf32> to vector<16x16xf32>
    %510 = vector.broadcast %507 : f32 to vector<16x16xf32>
    %511 = arith.mulf %510, %509 : vector<16x16xf32>
    %512 = arith.addf %506, %511 : vector<16x16xf32>
    %c81 = arith.constant 81 : index
    %513 = memref.load %arg1[%c81] : memref<98xf32, #tpu.memory_space<smem>>
    %c1_274 = arith.constant 1 : index
    %c4_275 = arith.constant 4 : index
    %c4_276 = arith.constant 4 : index
    %514 = vector.load %arg4[%c1_274, %c4_275, %c4_276] : memref<2x22x22xf32, #tpu.memory_space<vmem>>, vector<1x16x16xf32>
    %515 = vector.shape_cast %514 : vector<1x16x16xf32> to vector<16x16xf32>
    %516 = vector.broadcast %513 : f32 to vector<16x16xf32>
    %517 = arith.mulf %516, %515 : vector<16x16xf32>
    %518 = arith.addf %512, %517 : vector<16x16xf32>
    %c82 = arith.constant 82 : index
    %519 = memref.load %arg1[%c82] : memref<98xf32, #tpu.memory_space<smem>>
    %c1_277 = arith.constant 1 : index
    %c4_278 = arith.constant 4 : index
    %c5_279 = arith.constant 5 : index
    %520 = vector.load %arg4[%c1_277, %c4_278, %c5_279] : memref<2x22x22xf32, #tpu.memory_space<vmem>>, vector<1x16x16xf32>
    %521 = vector.shape_cast %520 : vector<1x16x16xf32> to vector<16x16xf32>
    %522 = vector.broadcast %519 : f32 to vector<16x16xf32>
    %523 = arith.mulf %522, %521 : vector<16x16xf32>
    %524 = arith.addf %518, %523 : vector<16x16xf32>
    %c83 = arith.constant 83 : index
    %525 = memref.load %arg1[%c83] : memref<98xf32, #tpu.memory_space<smem>>
    %c1_280 = arith.constant 1 : index
    %c4_281 = arith.constant 4 : index
    %c6_282 = arith.constant 6 : index
    %526 = vector.load %arg4[%c1_280, %c4_281, %c6_282] : memref<2x22x22xf32, #tpu.memory_space<vmem>>, vector<1x16x16xf32>
    %527 = vector.shape_cast %526 : vector<1x16x16xf32> to vector<16x16xf32>
    %528 = vector.broadcast %525 : f32 to vector<16x16xf32>
    %529 = arith.mulf %528, %527 : vector<16x16xf32>
    %530 = arith.addf %524, %529 : vector<16x16xf32>
    %c84 = arith.constant 84 : index
    %531 = memref.load %arg1[%c84] : memref<98xf32, #tpu.memory_space<smem>>
    %c1_283 = arith.constant 1 : index
    %c5_284 = arith.constant 5 : index
    %c0_285 = arith.constant 0 : index
    %532 = vector.load %arg4[%c1_283, %c5_284, %c0_285] : memref<2x22x22xf32, #tpu.memory_space<vmem>>, vector<1x16x16xf32>
    %533 = vector.shape_cast %532 : vector<1x16x16xf32> to vector<16x16xf32>
    %534 = vector.broadcast %531 : f32 to vector<16x16xf32>
    %535 = arith.mulf %534, %533 : vector<16x16xf32>
    %536 = arith.addf %530, %535 : vector<16x16xf32>
    %c85 = arith.constant 85 : index
    %537 = memref.load %arg1[%c85] : memref<98xf32, #tpu.memory_space<smem>>
    %c1_286 = arith.constant 1 : index
    %c5_287 = arith.constant 5 : index
    %c1_288 = arith.constant 1 : index
    %538 = vector.load %arg4[%c1_286, %c5_287, %c1_288] : memref<2x22x22xf32, #tpu.memory_space<vmem>>, vector<1x16x16xf32>
    %539 = vector.shape_cast %538 : vector<1x16x16xf32> to vector<16x16xf32>
    %540 = vector.broadcast %537 : f32 to vector<16x16xf32>
    %541 = arith.mulf %540, %539 : vector<16x16xf32>
    %542 = arith.addf %536, %541 : vector<16x16xf32>
    %c86 = arith.constant 86 : index
    %543 = memref.load %arg1[%c86] : memref<98xf32, #tpu.memory_space<smem>>
    %c1_289 = arith.constant 1 : index
    %c5_290 = arith.constant 5 : index
    %c2_291 = arith.constant 2 : index
    %544 = vector.load %arg4[%c1_289, %c5_290, %c2_291] : memref<2x22x22xf32, #tpu.memory_space<vmem>>, vector<1x16x16xf32>
    %545 = vector.shape_cast %544 : vector<1x16x16xf32> to vector<16x16xf32>
    %546 = vector.broadcast %543 : f32 to vector<16x16xf32>
    %547 = arith.mulf %546, %545 : vector<16x16xf32>
    %548 = arith.addf %542, %547 : vector<16x16xf32>
    %c87 = arith.constant 87 : index
    %549 = memref.load %arg1[%c87] : memref<98xf32, #tpu.memory_space<smem>>
    %c1_292 = arith.constant 1 : index
    %c5_293 = arith.constant 5 : index
    %c3_294 = arith.constant 3 : index
    %550 = vector.load %arg4[%c1_292, %c5_293, %c3_294] : memref<2x22x22xf32, #tpu.memory_space<vmem>>, vector<1x16x16xf32>
    %551 = vector.shape_cast %550 : vector<1x16x16xf32> to vector<16x16xf32>
    %552 = vector.broadcast %549 : f32 to vector<16x16xf32>
    %553 = arith.mulf %552, %551 : vector<16x16xf32>
    %554 = arith.addf %548, %553 : vector<16x16xf32>
    %c88 = arith.constant 88 : index
    %555 = memref.load %arg1[%c88] : memref<98xf32, #tpu.memory_space<smem>>
    %c1_295 = arith.constant 1 : index
    %c5_296 = arith.constant 5 : index
    %c4_297 = arith.constant 4 : index
    %556 = vector.load %arg4[%c1_295, %c5_296, %c4_297] : memref<2x22x22xf32, #tpu.memory_space<vmem>>, vector<1x16x16xf32>
    %557 = vector.shape_cast %556 : vector<1x16x16xf32> to vector<16x16xf32>
    %558 = vector.broadcast %555 : f32 to vector<16x16xf32>
    %559 = arith.mulf %558, %557 : vector<16x16xf32>
    %560 = arith.addf %554, %559 : vector<16x16xf32>
    %c89 = arith.constant 89 : index
    %561 = memref.load %arg1[%c89] : memref<98xf32, #tpu.memory_space<smem>>
    %c1_298 = arith.constant 1 : index
    %c5_299 = arith.constant 5 : index
    %c5_300 = arith.constant 5 : index
    %562 = vector.load %arg4[%c1_298, %c5_299, %c5_300] : memref<2x22x22xf32, #tpu.memory_space<vmem>>, vector<1x16x16xf32>
    %563 = vector.shape_cast %562 : vector<1x16x16xf32> to vector<16x16xf32>
    %564 = vector.broadcast %561 : f32 to vector<16x16xf32>
    %565 = arith.mulf %564, %563 : vector<16x16xf32>
    %566 = arith.addf %560, %565 : vector<16x16xf32>
    %c90 = arith.constant 90 : index
    %567 = memref.load %arg1[%c90] : memref<98xf32, #tpu.memory_space<smem>>
    %c1_301 = arith.constant 1 : index
    %c5_302 = arith.constant 5 : index
    %c6_303 = arith.constant 6 : index
    %568 = vector.load %arg4[%c1_301, %c5_302, %c6_303] : memref<2x22x22xf32, #tpu.memory_space<vmem>>, vector<1x16x16xf32>
    %569 = vector.shape_cast %568 : vector<1x16x16xf32> to vector<16x16xf32>
    %570 = vector.broadcast %567 : f32 to vector<16x16xf32>
    %571 = arith.mulf %570, %569 : vector<16x16xf32>
    %572 = arith.addf %566, %571 : vector<16x16xf32>
    %c91 = arith.constant 91 : index
    %573 = memref.load %arg1[%c91] : memref<98xf32, #tpu.memory_space<smem>>
    %c1_304 = arith.constant 1 : index
    %c6_305 = arith.constant 6 : index
    %c0_306 = arith.constant 0 : index
    %574 = vector.load %arg4[%c1_304, %c6_305, %c0_306] : memref<2x22x22xf32, #tpu.memory_space<vmem>>, vector<1x16x16xf32>
    %575 = vector.shape_cast %574 : vector<1x16x16xf32> to vector<16x16xf32>
    %576 = vector.broadcast %573 : f32 to vector<16x16xf32>
    %577 = arith.mulf %576, %575 : vector<16x16xf32>
    %578 = arith.addf %572, %577 : vector<16x16xf32>
    %c92 = arith.constant 92 : index
    %579 = memref.load %arg1[%c92] : memref<98xf32, #tpu.memory_space<smem>>
    %c1_307 = arith.constant 1 : index
    %c6_308 = arith.constant 6 : index
    %c1_309 = arith.constant 1 : index
    %580 = vector.load %arg4[%c1_307, %c6_308, %c1_309] : memref<2x22x22xf32, #tpu.memory_space<vmem>>, vector<1x16x16xf32>
    %581 = vector.shape_cast %580 : vector<1x16x16xf32> to vector<16x16xf32>
    %582 = vector.broadcast %579 : f32 to vector<16x16xf32>
    %583 = arith.mulf %582, %581 : vector<16x16xf32>
    %584 = arith.addf %578, %583 : vector<16x16xf32>
    %c93 = arith.constant 93 : index
    %585 = memref.load %arg1[%c93] : memref<98xf32, #tpu.memory_space<smem>>
    %c1_310 = arith.constant 1 : index
    %c6_311 = arith.constant 6 : index
    %c2_312 = arith.constant 2 : index
    %586 = vector.load %arg4[%c1_310, %c6_311, %c2_312] : memref<2x22x22xf32, #tpu.memory_space<vmem>>, vector<1x16x16xf32>
    %587 = vector.shape_cast %586 : vector<1x16x16xf32> to vector<16x16xf32>
    %588 = vector.broadcast %585 : f32 to vector<16x16xf32>
    %589 = arith.mulf %588, %587 : vector<16x16xf32>
    %590 = arith.addf %584, %589 : vector<16x16xf32>
    %c94 = arith.constant 94 : index
    %591 = memref.load %arg1[%c94] : memref<98xf32, #tpu.memory_space<smem>>
    %c1_313 = arith.constant 1 : index
    %c6_314 = arith.constant 6 : index
    %c3_315 = arith.constant 3 : index
    %592 = vector.load %arg4[%c1_313, %c6_314, %c3_315] : memref<2x22x22xf32, #tpu.memory_space<vmem>>, vector<1x16x16xf32>
    %593 = vector.shape_cast %592 : vector<1x16x16xf32> to vector<16x16xf32>
    %594 = vector.broadcast %591 : f32 to vector<16x16xf32>
    %595 = arith.mulf %594, %593 : vector<16x16xf32>
    %596 = arith.addf %590, %595 : vector<16x16xf32>
    %c95 = arith.constant 95 : index
    %597 = memref.load %arg1[%c95] : memref<98xf32, #tpu.memory_space<smem>>
    %c1_316 = arith.constant 1 : index
    %c6_317 = arith.constant 6 : index
    %c4_318 = arith.constant 4 : index
    %598 = vector.load %arg4[%c1_316, %c6_317, %c4_318] : memref<2x22x22xf32, #tpu.memory_space<vmem>>, vector<1x16x16xf32>
    %599 = vector.shape_cast %598 : vector<1x16x16xf32> to vector<16x16xf32>
    %600 = vector.broadcast %597 : f32 to vector<16x16xf32>
    %601 = arith.mulf %600, %599 : vector<16x16xf32>
    %602 = arith.addf %596, %601 : vector<16x16xf32>
    %c96 = arith.constant 96 : index
    %603 = memref.load %arg1[%c96] : memref<98xf32, #tpu.memory_space<smem>>
    %c1_319 = arith.constant 1 : index
    %c6_320 = arith.constant 6 : index
    %c5_321 = arith.constant 5 : index
    %604 = vector.load %arg4[%c1_319, %c6_320, %c5_321] : memref<2x22x22xf32, #tpu.memory_space<vmem>>, vector<1x16x16xf32>
    %605 = vector.shape_cast %604 : vector<1x16x16xf32> to vector<16x16xf32>
    %606 = vector.broadcast %603 : f32 to vector<16x16xf32>
    %607 = arith.mulf %606, %605 : vector<16x16xf32>
    %608 = arith.addf %602, %607 : vector<16x16xf32>
    %c97 = arith.constant 97 : index
    %609 = memref.load %arg1[%c97] : memref<98xf32, #tpu.memory_space<smem>>
    %c1_322 = arith.constant 1 : index
    %c6_323 = arith.constant 6 : index
    %c6_324 = arith.constant 6 : index
    %610 = vector.load %arg4[%c1_322, %c6_323, %c6_324] : memref<2x22x22xf32, #tpu.memory_space<vmem>>, vector<1x16x16xf32>
    %611 = vector.shape_cast %610 : vector<1x16x16xf32> to vector<16x16xf32>
    %612 = vector.broadcast %609 : f32 to vector<16x16xf32>
    %613 = arith.mulf %612, %611 : vector<16x16xf32>
    %614 = arith.addf %608, %613 : vector<16x16xf32>
    %c0_325 = arith.constant 0 : index
    %c0_326 = arith.constant 0 : index
    %c0_327 = arith.constant 0 : index
    %c0_328 = arith.constant 0 : index
    %615 = vector.load %arg3[%c0_325, %c0_326, %c0_327, %c0_328] : memref<1x1x16x16xf32, #tpu.memory_space<vmem>>, vector<1x1x16x16xf32>
    %616 = vector.shape_cast %615 : vector<1x1x16x16xf32> to vector<16x16xf32>
    %617 = vector.shape_cast %614 : vector<16x16xf32> to vector<1x1x16x16xf32>
    tpu.vector_store %arg3[%c0_325, %c0_326, %c0_327, %c0_328], %617 {strides = array<i32>} : memref<1x1x16x16xf32, #tpu.memory_space<vmem>>, vector<1x1x16x16xf32>,
    return
  }
  func.func @transform_0(%arg0: i32) -> i32 {
    %c0_i32 = arith.constant 0 : i32
    %c0_i32_0 = arith.constant 0 : i32
    return %c0_i32 : i32
  }
  func.func @transform_1(%arg0: i32) -> (i32, i32, i32, i32) {
    %c0_i32 = arith.constant 0 : i32
    %c0_i32_0 = arith.constant 0 : i32
    %c0_i32_1 = arith.constant 0 : i32
    %c0_i32_2 = arith.constant 0 : i32
    return %arg0, %c0_i32, %c0_i32_0, %c0_i32_1 : i32, i32, i32, i32
  }
  func.func @transform_2(%arg0: i32) -> (i32, i32, i32, i32) {
    %c0_i32 = arith.constant 0 : i32
    %c0_i32_0 = arith.constant 0 : i32
    %c0_i32_1 = arith.constant 0 : i32
    %c0_i32_2 = arith.constant 0 : i32
    return %arg0, %c0_i32, %c0_i32_0, %c0_i32_1 : i32, i32, i32, i32
  }
}

</mosaic_0001>

<llo_original>
// kernel: spatial_gate_forward.3
$region0: #{spatial_gate_forward.3}
  #allocation0 [shape = 'u32[]', space=smem, size = 0x4, offset = 0x4, fixed_abs, tag = 'smem constant byte address 0x4 - core index']
  #allocation1 [shape = 'u32[144,128]{1,0:T(1,128)}', space=vmem, size = 0x12000, scoped, tag = 'internal scratch']
  %s0 = inlined_call_operand.vmem [shape: f32[2], index: 0, kind: input, shape index: {}]
  %s1 = inlined_call_operand.vmem [shape: f32[2,1,16,16], index: 1, kind: input, shape index: {}]
  %s2 = inlined_call_operand.hbm [shape: f32[2,1,16,16], index: 2, kind: output, shape index: {}]
  %s3 = sld [smem:[#allocation0]]
  $region45: #{spatial_gate_forward.3} parent=0
    _
  %s5 = ssub.s32 1, %s3
  %s6 = scalar_select 0, %s5, %s3
  $region1: #{spatial_gate_forward.3} parent=0
    #allocation2 [shape = 'u8[512]{0}', space=smem, size = 0x200, scoped, tag = 'input window, operand 0, single buffered']
    #allocation3 [shape = 's32[2]{0}', space=sflag, size = 0x8, scoped, tag = 'scoped memory for spatial_gate_forward.3']
    #allocation4 [shape = 's32[2]{0}', space=sflag, size = 0x8, scoped, tag = 'scoped memory for spatial_gate_forward.3']
    #allocation5 [shape = 'u8[16384]{0}', space=vmem, size = 0x4000, scoped, tag = 'output window, operand 0']
    %7 = vsyncpa [#allocation4], 0
    %8 = vsyncpa [#allocation3], 0
    %s9 = scalar_lea.sflag [#allocation3], 1
    %10 = vsyncpa %s9, 0
    loop: start=0, step=1, limit=4
    $region2: #{spatial_gate_forward.3} parent=1 // loop_pre_header
      _
    $region3: #{spatial_gate_forward.3} parent=1 // loop_header
      %s12 = sphi 0, %s16
      %p13 = scmp.ge.s32.totalorder %s12, 4
      %s20 = sphi 0, %s20
      %s22 = sphi 0, %s20
      %s23 = sphi 0, %s22
      %s37 = sphi 0, %s23
      %s43 = sphi 0, %s45
      %s46 = sphi 0, %s43
      %s47 = sphi 0, %s46
      %s63 = sphi 0, %s47
      %s69 = sphi 0, %s71
      %s72 = sphi 0, %s69
      %s73 = sphi 0, %s72
      %s89 = sphi 0, %s73
    $region4: #{spatial_gate_forward.3} parent=1 // loop_header_branch
      %15 = sbr.rel (%p13) target = $region8
    $region5: #{spatial_gate_forward.3} parent=1 // loop_body
      %s17 = ssub.s32 %s12, 1
      %s18 = ssub.s32 %s12, 2
      %s19 = sadd.s32 %s12, 1
      %s21 = sadd.s32 %s20, 1
      %p24 = scmp.eq.s32.totalorder %s12, 1
      %p25 = scmp.ne.s32.totalorder %s20, %s22
      %p26 = scmp.eq.s32.totalorder %s12, 0
      %p27 = por %p25, %p26
      %p28 = scmp.ne.s32.totalorder %s20, %s22
      %p29 = scmp.eq.s32.totalorder %s17, 1
      %p30 = por %p28, %p29
      %p31 = scmp.ne.s32.totalorder %s22, %s23
      %p32 = scmp.eq.s32.totalorder %s17, 0
      %p33 = por %p31, %p32
      %p34 = scmp.ne.s32.totalorder %s22, %s23
      %p35 = scmp.eq.s32.totalorder %s18, 1
      %p36 = por %p34, %p35
      %p38 = scmp.ne.s32.totalorder %s23, %s37
      %p39 = scmp.eq.s32.totalorder %s18, 0
      %p40 = por %p38, %p39
      %s41 = ssub.s32 %s12, %s19
      %p42 = scmp.eq.s32.totalorder %s41, 0
      %s44 = sadd.s32 %s43, 1
      %s45 = scalar_select %p42, %s43, %s44
      %p48 = pneg %p42
      %p49 = scmp.eq.s32.totalorder %s12, 1
      %p50 = por %p48, %p49
      %p51 = scmp.ne.s32.totalorder %s43, %s46
      %p52 = scmp.eq.s32.totalorder %s12, 0
      %p53 = por %p51, %p52
      %p54 = scmp.ne.s32.totalorder %s43, %s46
      %p55 = scmp.eq.s32.totalorder %s17, 1
      %p56 = por %p54, %p55
      %p57 = scmp.ne.s32.totalorder %s46, %s47
      %p58 = scmp.eq.s32.totalorder %s17, 0
      %p59 = por %p57, %p58
      %p60 = scmp.ne.s32.totalorder %s46, %s47
      %p61 = scmp.eq.s32.totalorder %s18, 1
      %p62 = por %p60, %p61
      %p64 = scmp.ne.s32.totalorder %s47, %s63
      %p65 = scmp.eq.s32.totalorder %s18, 0
      %p66 = por %p64, %p65
      %s67 = ssub.s32 %s12, %s19
      %p68 = scmp.eq.s32.totalorder %s67, 0
      %s70 = sadd.s32 %s69, 1
      %s71 = scalar_select %p68, %s69, %s70
      %p74 = pneg %p68
      %p75 = scmp.eq.s32.totalorder %s12, 1
      %p76 = por %p74, %p75
      %p77 = scmp.ne.s32.totalorder %s69, %s72
      %p78 = scmp.eq.s32.totalorder %s12, 0
      %p79 = por %p77, %p78
      %p80 = scmp.ne.s32.totalorder %s69, %s72
      %p81 = scmp.eq.s32.totalorder %s17, 1
      %p82 = por %p80, %p81
      %p83 = scmp.ne.s32.totalorder %s72, %s73
      %p84 = scmp.eq.s32.totalorder %s17, 0
      %p85 = por %p83, %p84
      %p86 = scmp.ne.s32.totalorder %s72, %s73
      %p87 = scmp.eq.s32.totalorder %s18, 1
      %p88 = por %p86, %p87
      %p90 = scmp.ne.s32.totalorder %s73, %s89
      %p91 = scmp.eq.s32.totalorder %s18, 0
      %p92 = por %p90, %p91
      %p93 = scmp.le.s32.totalorder 1, %s12
      %p94 = scmp.lt.s32.totalorder %s12, 3
      %p95 = pnand %p93, %p94
      %p96 = pneg %p95
      // Predicated region
      $region9: #{spatial_gate_forward.3} parent=5 // pred_check
        _
      $region10: #{spatial_gate_forward.3} parent=5 // pred_check_branch
        %98 = sbr.rel (%p95) target = $region12
      $region11: #{spatial_gate_forward.3} parent=5 // pred_region
        %s99 = ssub.s32 %s12, 1
        // Predicated region
        $region13: #{spatial_gate_forward.3} parent=11 // pred_check
          %p100 = pneg %p33
        $region14: #{spatial_gate_forward.3} parent=11 // pred_check_branch
          %102 = sbr.rel (%p100) target = $region16
        $region15: #{spatial_gate_forward.3} parent=11 // pred_region
          %s104 = ssub.s32 16, 16
          %105 = vsyncadd [#allocation4], %s104
          %s107 = sshll.u32 %s0, 4
          %s108 = int_to_ptr.vmem [resolvable:$true] %s107
          %110 = dma.vmem_to_smem %s108, 16, [#allocation2], [#allocation4]
        $region16: #{spatial_gate_forward.3} parent=11 // pred_fallthru
          _
      $region12: #{spatial_gate_forward.3} parent=5 // pred_fallthru
        _
      %p111 = scmp.lt.s32.totalorder %s12, 2
      // Predicated region
      $region17: #{spatial_gate_forward.3} parent=5 // pred_check
        %p112 = pneg %p111
      $region18: #{spatial_gate_forward.3} parent=5 // pred_check_branch
        %114 = sbr.rel (%p112) target = $region20
      $region19: #{spatial_gate_forward.3} parent=5 // pred_region
        // Predicated region
        $region21: #{spatial_gate_forward.3} parent=19 // pred_check
          %p115 = pneg %p53
        $region22: #{spatial_gate_forward.3} parent=19 // pred_check_branch
          %117 = sbr.rel (%p115) target = $region24
        $region23: #{spatial_gate_forward.3} parent=19 // pred_region
          %p118 = scmp.lt.s32.totalorder %s12, 1
          %s119 = scalar_select %p118, %s12, 1
          %s120 = smul.addr %s119, 2
          %s121 = smul.addr %s120, 8
          %s122 = scalar_lea.vmem %s1, %s121
        $region24: #{spatial_gate_forward.3} parent=19 // pred_fallthru
          _
      $region20: #{spatial_gate_forward.3} parent=5 // pred_fallthru
        _
      %p123 = scmp.le.s32.totalorder 1, %s12
      %p124 = scmp.lt.s32.totalorder %s12, 3
      %p125 = pnand %p123, %p124
      %p126 = pneg %p125
      // Predicated region
      $region25: #{spatial_gate_forward.3} parent=5 // pred_check
        _
      $region26: #{spatial_gate_forward.3} parent=5 // pred_check_branch
        %128 = sbr.rel (%p125) target = $region28
      $region27: #{spatial_gate_forward.3} parent=5 // pred_region
        %s129 = ssub.s32 %s12, 1
        // Predicated region
        $region29: #{spatial_gate_forward.3} parent=27 // pred_check
          %p130 = pneg %p33
        $region30: #{spatial_gate_forward.3} parent=27 // pred_check_branch
          %132 = sbr.rel (%p130) target = $region32
        $region31: #{spatial_gate_forward.3} parent=27 // pred_region
          %133 = dma.done [#allocation4], 16
        $region32: #{spatial_gate_forward.3} parent=27 // pred_fallthru
          _
        %134 = sfence
        %p135 = pneg %p33
        %p136 = pneg %p30
        %p137 = scmp.lt.s32.totalorder %s17, 1
        %s138 = scalar_select %p137, %s17, 1
        %s139 = smul.addr %s138, 2
        %s140 = smul.addr %s139, 8
        %s141 = scalar_lea.vmem %s1, %s140
        %p142 = pneg %p59
        %p143 = pneg %p56
        %p144 = pneg %p85
        %p145 = pneg %p82
        %s146 = sand.u32 %s72, 1
        %s147 = scalar_lea.sflag [#allocation3], %s146
        %s148 = sand.u32 %s72, 1
        %s149 = smul.addr %s148, 16
        %s150 = scalar_lea.vmem [#allocation5], %s149
        %p151 = scmp.lt.s32.totalorder %s17, 1
        %s152 = scalar_select %p151, %s17, 1
        %s153 = smul.addr %s152, 2
        %s154 = smul.addr %s153, 8
        %s155 = scalar_lea.vmem %s1, %s154
        %s156 = sld [smem:[#allocation2]]
        %s157 = sld [smem:[#allocation2 + $0x1]]
        %v158 = vld [vmem:[%s155] sm:$0xff]
        %v159 = vld [vmem:[%s155 + $0x8] sm:$0xff]
        %v160 = vstv %s156
        %v161 = vmul.f32 %v158, %v160
        %v162 = vmul.f32 %v159, %v160
        %v163 = vstv %s157
        %v164 = vadd.f32 %v161, %v163
        %v165 = vadd.f32 %v162, %v163
        %v166 = vsub.f32 0.0, %v164
        %v167 = vsub.f32 0.0, %v165
        %v168 = vmul.f32 %v166, 1.442695
        %v169 = vpow.pop %v168
        %v170 = vmul.f32 %v167, 1.442695
        %v171 = vpow.pop %v170
        %v172 = vadd.f32 %v169, 1.0
        %v173 = vadd.f32 %v171, 1.0
        %v174 = vrcp.pop %v172
        %v175 = vmul.f32 1.0, %v174
        %v176 = vrcp.pop %v173
        %v177 = vmul.f32 1.0, %v176
        %vm178 = vcmask 130048
        %179 = vst.msk [vmem:[%s150] sm:$0xff] %vm178, %v175
        %180 = vst.msk [vmem:[%s150 + $0x8] sm:$0xff] %vm178, %v177
        %s181 = sand.u32 %s72, 1
        %s182 = scalar_lea.sflag [#allocation3], %s181
        %s183 = sand.u32 %s72, 1
        %s184 = smul.addr %s183, 16
        %s185 = scalar_lea.vmem [#allocation5], %s184
        // Predicated region
        $region33: #{spatial_gate_forward.3} parent=27 // pred_check
          %p186 = pneg %p82
        $region34: #{spatial_gate_forward.3} parent=27 // pred_check_branch
          %188 = sbr.rel (%p186) target = $region36
        $region35: #{spatial_gate_forward.3} parent=27 // pred_region
          %s190 = ssub.s32 256, 256
          %191 = vsyncadd %s182, %s190
          %s192 = smul.addr %s17, 2
          %s193 = smul.addr %s192, 128
          %s194 = scalar_lea.hbm %s2, %s193
          %s195 = sshll.u32 %s185, 4
          %s196 = int_to_ptr.vmem [resolvable:$true] %s195
          %201 = dma.vmem_to_hbm [thread:$0]  %s196, 256, %s194, %s182, 128, 128, 8
        $region36: #{spatial_gate_forward.3} parent=27 // pred_fallthru
          _
      $region28: #{spatial_gate_forward.3} parent=5 // pred_fallthru
        _
      %p202 = scmp.le.s32.totalorder 2, %s12
      // Predicated region
      $region37: #{spatial_gate_forward.3} parent=5 // pred_check
        %p203 = pneg %p202
      $region38: #{spatial_gate_forward.3} parent=5 // pred_check_branch
        %205 = sbr.rel (%p203) target = $region40
      $region39: #{spatial_gate_forward.3} parent=5 // pred_region
        %s206 = ssub.s32 %s12, 2
        // Predicated region
        $region41: #{spatial_gate_forward.3} parent=39 // pred_check
          %p207 = pneg %p88
        $region42: #{spatial_gate_forward.3} parent=39 // pred_check_branch
          %209 = sbr.rel (%p207) target = $region44
        $region43: #{spatial_gate_forward.3} parent=39 // pred_region
          %s210 = sand.u32 %s73, 1
          %s211 = scalar_lea.sflag [#allocation3], %s210
          %s212 = sand.u32 %s73, 1
          %s213 = smul.addr %s212, 16
          %s214 = scalar_lea.vmem [#allocation5], %s213
          %215 = dma.done %s211, 256
        $region44: #{spatial_gate_forward.3} parent=39 // pred_fallthru
          _
      $region40: #{spatial_gate_forward.3} parent=5 // pred_fallthru
        _
    $region6: #{spatial_gate_forward.3} parent=1 // loop_footer
      %s16 = sadd.s32 1, %s12
    $region7: #{spatial_gate_forward.3} parent=1 // loop_footer_branch
      %11 = sbr.rel target = $region3
    $region8: #{spatial_gate_forward.3} parent=1 // loop_exit
      _
    %216 = vsyncpa [#allocation3], 1
    %s217 = scalar_lea.sflag [#allocation3], 1
    %218 = vsyncpa %s217, 1
    %219 = vsyncpa [#allocation4], 1
    %s220 = scalar_lea.sflag [#allocation4], 1
    %221 = vsyncpa %s220, 1

// kernel: spatial_gate_forward.2
$region0: #{spatial_gate_forward.2}
  #allocation0 [shape = 'u32[]', space=smem, size = 0x4, offset = 0x4, fixed_abs, tag = 'smem constant byte address 0x4 - core index']
  #allocation1 [shape = 'u32[144,128]{1,0:T(1,128)}', space=vmem, size = 0x12000, scoped, tag = 'internal scratch']
  #allocation2 [shape = 'f32[2,22,22]{2,1,0:T(8,128)}', space=vmem, size = 0x6000, scoped, tag = 'scratch operand']
  %s0 = inlined_call_operand.vmem [shape: f32[98], index: 0, kind: input, shape index: {}]
  %s1 = inlined_call_operand.hbm [shape: f32[2,4,16,16], index: 1, kind: input, shape index: {}]
  %s2 = inlined_call_operand.vmem [shape: f32[2,1,16,16], index: 2, kind: output, shape index: {}]
  %s3 = sld [smem:[#allocation0]]
  $region49: #{spatial_gate_forward.2} parent=0
    _
  %s5 = ssub.s32 1, %s3
  %s6 = scalar_select 0, %s5, %s3
  $region1: #{spatial_gate_forward.2} parent=0
    #allocation3 [shape = 'u8[512]{0}', space=smem, size = 0x200, scoped, tag = 'input window, operand 0, single buffered']
    #allocation4 [shape = 's32[2]{0}', space=sflag, size = 0x8, scoped, tag = 'scoped memory for spatial_gate_forward.2']
    #allocation5 [shape = 's32[2]{0}', space=sflag, size = 0x8, scoped, tag = 'scoped memory for spatial_gate_forward.2']
    #allocation6 [shape = 'u8[65536]{0}', space=vmem, size = 0x10000, scoped, tag = 'input window, operand 1']
    %7 = vsyncpa [#allocation5], 0
    %8 = vsyncpa [#allocation4], 0
    %s9 = scalar_lea.sflag [#allocation4], 1
    %10 = vsyncpa %s9, 0
    loop: start=0, step=1, limit=4
    $region2: #{spatial_gate_forward.2} parent=1 // loop_pre_header
      _
    $region3: #{spatial_gate_forward.2} parent=1 // loop_header
      %s12 = sphi 0, %s16
      %p13 = scmp.ge.s32.totalorder %s12, 4
      %s20 = sphi 0, %s20
      %s22 = sphi 0, %s20
      %s23 = sphi 0, %s22
      %s37 = sphi 0, %s23
      %s43 = sphi 0, %s45
      %s46 = sphi 0, %s43
      %s47 = sphi 0, %s46
      %s63 = sphi 0, %s47
      %s69 = sphi 0, %s71
      %s72 = sphi 0, %s69
      %s73 = sphi 0, %s72
      %s89 = sphi 0, %s73
    $region4: #{spatial_gate_forward.2} parent=1 // loop_header_branch
      %15 = sbr.rel (%p13) target = $region8
    $region5: #{spatial_gate_forward.2} parent=1 // loop_body
      %s17 = ssub.s32 %s12, 1
      %s18 = ssub.s32 %s12, 2
      %s19 = sadd.s32 %s12, 1
      %s21 = sadd.s32 %s20, 1
      %p24 = scmp.eq.s32.totalorder %s12, 1
      %p25 = scmp.ne.s32.totalorder %s20, %s22
      %p26 = scmp.eq.s32.totalorder %s12, 0
      %p27 = por %p25, %p26
      %p28 = scmp.ne.s32.totalorder %s20, %s22
      %p29 = scmp.eq.s32.totalorder %s17, 1
      %p30 = por %p28, %p29
      %p31 = scmp.ne.s32.totalorder %s22, %s23
      %p32 = scmp.eq.s32.totalorder %s17, 0
      %p33 = por %p31, %p32
      %p34 = scmp.ne.s32.totalorder %s22, %s23
      %p35 = scmp.eq.s32.totalorder %s18, 1
      %p36 = por %p34, %p35
      %p38 = scmp.ne.s32.totalorder %s23, %s37
      %p39 = scmp.eq.s32.totalorder %s18, 0
      %p40 = por %p38, %p39
      %s41 = ssub.s32 %s12, %s19
      %p42 = scmp.eq.s32.totalorder %s41, 0
      %s44 = sadd.s32 %s43, 1
      %s45 = scalar_select %p42, %s43, %s44
      %p48 = pneg %p42
      %p49 = scmp.eq.s32.totalorder %s12, 1
      %p50 = por %p48, %p49
      %p51 = scmp.ne.s32.totalorder %s43, %s46
      %p52 = scmp.eq.s32.totalorder %s12, 0
      %p53 = por %p51, %p52
      %p54 = scmp.ne.s32.totalorder %s43, %s46
      %p55 = scmp.eq.s32.totalorder %s17, 1
      %p56 = por %p54, %p55
      %p57 = scmp.ne.s32.totalorder %s46, %s47
      %p58 = scmp.eq.s32.totalorder %s17, 0
      %p59 = por %p57, %p58
      %p60 = scmp.ne.s32.totalorder %s46, %s47
      %p61 = scmp.eq.s32.totalorder %s18, 1
      %p62 = por %p60, %p61
      %p64 = scmp.ne.s32.totalorder %s47, %s63
      %p65 = scmp.eq.s32.totalorder %s18, 0
      %p66 = por %p64, %p65
      %s67 = ssub.s32 %s12, %s19
      %p68 = scmp.eq.s32.totalorder %s67, 0
      %s70 = sadd.s32 %s69, 1
      %s71 = scalar_select %p68, %s69, %s70
      %p74 = pneg %p68
      %p75 = scmp.eq.s32.totalorder %s12, 1
      %p76 = por %p74, %p75
      %p77 = scmp.ne.s32.totalorder %s69, %s72
      %p78 = scmp.eq.s32.totalorder %s12, 0
      %p79 = por %p77, %p78
      %p80 = scmp.ne.s32.totalorder %s69, %s72
      %p81 = scmp.eq.s32.totalorder %s17, 1
      %p82 = por %p80, %p81
      %p83 = scmp.ne.s32.totalorder %s72, %s73
      %p84 = scmp.eq.s32.totalorder %s17, 0
      %p85 = por %p83, %p84
      %p86 = scmp.ne.s32.totalorder %s72, %s73
      %p87 = scmp.eq.s32.totalorder %s18, 1
      %p88 = por %p86, %p87
      %p90 = scmp.ne.s32.totalorder %s73, %s89
      %p91 = scmp.eq.s32.totalorder %s18, 0
      %p92 = por %p90, %p91
      %p93 = scmp.le.s32.totalorder 1, %s12
      %p94 = scmp.lt.s32.totalorder %s12, 3
      %p95 = pnand %p93, %p94
      %p96 = pneg %p95
      // Predicated region
      $region9: #{spatial_gate_forward.2} parent=5 // pred_check
        _
      $region10: #{spatial_gate_forward.2} parent=5 // pred_check_branch
        %98 = sbr.rel (%p95) target = $region12
      $region11: #{spatial_gate_forward.2} parent=5 // pred_region
        %s99 = ssub.s32 %s12, 1
        // Predicated region
        $region13: #{spatial_gate_forward.2} parent=11 // pred_check
          %p100 = pneg %p33
        $region14: #{spatial_gate_forward.2} parent=11 // pred_check_branch
          %102 = sbr.rel (%p100) target = $region16
        $region15: #{spatial_gate_forward.2} parent=11 // pred_region
          %s104 = ssub.s32 16, 16
          %105 = vsyncadd [#allocation5], %s104
          %s107 = sshll.u32 %s0, 4
          %s108 = int_to_ptr.vmem [resolvable:$true] %s107
          %110 = dma.vmem_to_smem %s108, 16, [#allocation3], [#allocation5]
        $region16: #{spatial_gate_forward.2} parent=11 // pred_fallthru
          _
      $region12: #{spatial_gate_forward.2} parent=5 // pred_fallthru
        _
      %p111 = scmp.lt.s32.totalorder %s12, 2
      // Predicated region
      $region17: #{spatial_gate_forward.2} parent=5 // pred_check
        %p112 = pneg %p111
      $region18: #{spatial_gate_forward.2} parent=5 // pred_check_branch
        %114 = sbr.rel (%p112) target = $region20
      $region19: #{spatial_gate_forward.2} parent=5 // pred_region
        // Predicated region
        $region21: #{spatial_gate_forward.2} parent=19 // pred_check
          %p115 = pneg %p53
        $region22: #{spatial_gate_forward.2} parent=19 // pred_check_branch
          %117 = sbr.rel (%p115) target = $region24
        $region23: #{spatial_gate_forward.2} parent=19 // pred_region
          %s118 = sand.u32 %s43, 1
          %s119 = scalar_lea.sflag [#allocation4], %s118
          %s120 = sand.u32 %s43, 1
          %s121 = smul.addr %s120, 64
          %s122 = scalar_lea.vmem [#allocation6], %s121
          %s124 = ssub.s32 1024, 1024
          %125 = vsyncadd %s119, %s124
          %s126 = smul.addr %s12, 8
          %s127 = smul.addr %s126, 128
          %s128 = scalar_lea.hbm %s1, %s127
          %s129 = sshll.u32 %s122, 4
          %s130 = int_to_ptr.vmem [resolvable:$true] %s129
          %135 = dma.hbm_to_vmem [thread:$0]  %s128, 1024, %s130, %s119, 128, 128, 8
        $region24: #{spatial_gate_forward.2} parent=19 // pred_fallthru
          _
      $region20: #{spatial_gate_forward.2} parent=5 // pred_fallthru
        _
      %p136 = scmp.le.s32.totalorder 1, %s12
      %p137 = scmp.lt.s32.totalorder %s12, 3
      %p138 = pnand %p136, %p137
      %p139 = pneg %p138
      // Predicated region
      $region25: #{spatial_gate_forward.2} parent=5 // pred_check
        _
      $region26: #{spatial_gate_forward.2} parent=5 // pred_check_branch
        %141 = sbr.rel (%p138) target = $region28
      $region27: #{spatial_gate_forward.2} parent=5 // pred_region
        %s142 = ssub.s32 %s12, 1
        // Predicated region
        $region29: #{spatial_gate_forward.2} parent=27 // pred_check
          %p143 = pneg %p33
        $region30: #{spatial_gate_forward.2} parent=27 // pred_check_branch
          %145 = sbr.rel (%p143) target = $region32
        $region31: #{spatial_gate_forward.2} parent=27 // pred_region
          %146 = dma.done [#allocation5], 16
        $region32: #{spatial_gate_forward.2} parent=27 // pred_fallthru
          _
        %s147 = sand.u32 %s46, 1
        %s148 = scalar_lea.sflag [#allocation4], %s147
        %s149 = sand.u32 %s46, 1
        %s150 = smul.addr %s149, 64
        %s151 = scalar_lea.vmem [#allocation6], %s150
        // Predicated region
        $region33: #{spatial_gate_forward.2} parent=27 // pred_check
          %p152 = pneg %p59
        $region34: #{spatial_gate_forward.2} parent=27 // pred_check_branch
          %154 = sbr.rel (%p152) target = $region36
        $region35: #{spatial_gate_forward.2} parent=27 // pred_region
          %155 = dma.done %s148, 1024
        $region36: #{spatial_gate_forward.2} parent=27 // pred_fallthru
          _
        %156 = sfence
        %p157 = pneg %p33
        %p158 = pneg %p30
        %s159 = sand.u32 %s46, 1
        %s160 = scalar_lea.sflag [#allocation4], %s159
        %s161 = sand.u32 %s46, 1
        %s162 = smul.addr %s161, 64
        %s163 = scalar_lea.vmem [#allocation6], %s162
        %p164 = pneg %p59
        %p165 = pneg %p56
        %p166 = pneg %p85
        %p167 = pneg %p82
        %p168 = scmp.lt.s32.totalorder %s17, 1
        %s169 = scalar_select %p168, %s17, 1
        %s170 = smul.addr %s169, 2
        %s171 = smul.addr %s170, 8
        %s172 = scalar_lea.vmem %s2, %s171
        %p173 = scmp.lt.s32.totalorder %s17, 1
        %s174 = scalar_select %p173, %s17, 1
        %s175 = smul.addr %s174, 2
        %s176 = smul.addr %s175, 8
        %s177 = scalar_lea.vmem %s2, %s176
        %v178 = vld [vmem:[%s151] sm:$0xff]
        %v179 = vld [vmem:[%s151 + $0x8] sm:$0xff]
        %s180 = scalar_lea.vmem %s151, 16 [#allocation6]
        %v181 = vld [vmem:[%s180] sm:$0xff]
        %v182 = vld [vmem:[%s180 + $0x8] sm:$0xff]
        %v183 = vmax.f32 %v178, %v181
        %v184 = vmax.f32 %v179, %v182
        %v185 = vadd.f32 %v178, %v181
        %v186 = vadd.f32 %v179, %v182
        %s187 = scalar_lea.vmem %s151, 32 [#allocation6]
        %v188 = vld [vmem:[%s187] sm:$0xff]
        %v189 = vld [vmem:[%s187 + $0x8] sm:$0xff]
        %v190 = vmax.f32 %v183, %v188
        %v191 = vmax.f32 %v184, %v189
        %v192 = vadd.f32 %v185, %v188
        %v193 = vadd.f32 %v186, %v189
        %s194 = scalar_lea.vmem %s151, 48 [#allocation6]
        %v195 = vld [vmem:[%s194] sm:$0xff]
        %v196 = vld [vmem:[%s194 + $0x8] sm:$0xff]
        %v197 = vmax.f32 %v190, %v195
        %v198 = vmax.f32 %v191, %v196
        %v199 = vadd.f32 %v192, %v195
        %v200 = vadd.f32 %v193, %v196
        %v201 = vmul.f32 %v199, 0.25
        %v202 = vmul.f32 %v200, 0.25
        %vm203 = vcmask 179200
        %204 = vst.msk [vmem:[#allocation2] sm:$0xff] %vm203, 0.0
        %205 = vst.msk [vmem:[#allocation2 + $0x8] sm:$0xff] %vm203, 0.0
        %vm206 = vcmask 177152
        %207 = vst.msk [vmem:[#allocation2 + $0x10] sm:$0x3f] %vm206, 0.0
        %208 = vst.msk [vmem:[#allocation2 + $0x18] sm:$0xff] %vm203, 0.0
        %209 = vst.msk [vmem:[#allocation2 + $0x20] sm:$0xff] %vm203, 0.0
        %210 = vst.msk [vmem:[#allocation2 + $0x28] sm:$0x3f] %vm206, 0.0
        %213 = vrot.lane.b32.xlu0 %v197, 3
        %v214 = vpop.permute.xlu0 %213
        %215 = vrot.lane.b32.xlu0 %v198, 3
        %v216 = vpop.permute.xlu0 %215
        %vm219 = vcmask 154648
        %220 = vst.msk [vmem:[#allocation2 + $0x3] sm:$0xff] %vm219, %v214
        %221 = vst.msk [vmem:[#allocation2 + $0xb] sm:$0xff] %vm219, %v216
        %224 = vrot.lane.b32.xlu0 %v201, 3
        %v225 = vpop.permute.xlu0 %224
        %226 = vrot.lane.b32.xlu0 %v202, 3
        %v227 = vpop.permute.xlu0 %226
        %s230 = scalar_lea.vmem [#allocation2], 24
        %231 = vst.msk [vmem:[%s230 + $0x3] sm:$0xff] %vm219, %v225
        %232 = vst.msk [vmem:[%s230 + $0xb] sm:$0xff] %vm219, %v227
        %s233 = sld [smem:[#allocation3]]
        %v234 = vld [vmem:[#allocation2] sm:$0xff]
        %v235 = vld [vmem:[#allocation2 + $0x8] sm:$0xff]
        %v236 = vstv %s233
        %v237 = vmul.f32 %v236, %v234
        %v238 = vmul.f32 %v236, %v235
        %v239 = vadd.f32 %v237, 0.0
        %v240 = vadd.f32 %v238, 0.0
        %s241 = sld [smem:[#allocation3 + $0x1]]
        %v242 = vstv %s241
        %v243 = vmul.f32 %v242, %v234
        %v244 = vmul.f32 %v242, %v235
        %247 = vrot.lane.b32.xlu0 %v243, 127
        %v248 = vpop.permute.xlu0 %247
        %249 = vrot.lane.b32.xlu0 %v244, 127
        %v250 = vpop.permute.xlu0 %249
        %v253 = vadd.f32 %v239, %v248
        %v254 = vadd.f32 %v240, %v250
        %s255 = sld [smem:[#allocation3 + $0x2]]
        %v256 = vstv %s255
        %v257 = vmul.f32 %v256, %v234
        %v258 = vmul.f32 %v256, %v235
        %261 = vrot.lane.b32.xlu0 %v257, 126
        %v262 = vpop.permute.xlu0 %261
        %263 = vrot.lane.b32.xlu0 %v258, 126
        %v264 = vpop.permute.xlu0 %263
        %v267 = vadd.f32 %v253, %v262
        %v268 = vadd.f32 %v254, %v264
        %s269 = sld [smem:[#allocation3 + $0x3]]
        %v270 = vstv %s269
        %v271 = vmul.f32 %v270, %v234
        %v272 = vmul.f32 %v270, %v235
        %275 = vrot.lane.b32.xlu0 %v271, 125
        %v276 = vpop.permute.xlu0 %275
        %277 = vrot.lane.b32.xlu0 %v272, 125
        %v278 = vpop.permute.xlu0 %277
        %v281 = vadd.f32 %v267, %v276
        %v282 = vadd.f32 %v268, %v278
        %s283 = sld [smem:[#allocation3 + $0x4]]
        %v284 = vstv %s283
        %v285 = vmul.f32 %v284, %v234
        %v286 = vmul.f32 %v284, %v235
        %289 = vrot.lane.b32.xlu0 %v285, 124
        %v290 = vpop.permute.xlu0 %289
        %291 = vrot.lane.b32.xlu0 %v286, 124
        %v292 = vpop.permute.xlu0 %291
        %v295 = vadd.f32 %v281, %v290
        %v296 = vadd.f32 %v282, %v292
        %s297 = sld [smem:[#allocation3 + $0x5]]
        %v298 = vstv %s297
        %v299 = vmul.f32 %v298, %v234
        %v300 = vmul.f32 %v298, %v235
        %303 = vrot.lane.b32.xlu0 %v299, 123
        %v304 = vpop.permute.xlu0 %303
        %305 = vrot.lane.b32.xlu0 %v300, 123
        %v306 = vpop.permute.xlu0 %305
        %v309 = vadd.f32 %v295, %v304
        %v310 = vadd.f32 %v296, %v306
        %s311 = sld [smem:[#allocation3 + $0x6]]
        %v312 = vstv %s311
        %v313 = vmul.f32 %v312, %v234
        %v314 = vmul.f32 %v312, %v235
        %317 = vrot.lane.b32.xlu0 %v313, 122
        %v318 = vpop.permute.xlu0 %317
        %319 = vrot.lane.b32.xlu0 %v314, 122
        %v320 = vpop.permute.xlu0 %319
        %v323 = vadd.f32 %v309, %v318
        %v324 = vadd.f32 %v310, %v320
        %s325 = sld [smem:[#allocation3 + $0x7]]
        %v326 = vld [vmem:[#allocation2 + $0x1] sm:$0xff]
        %v327 = vld [vmem:[#allocation2 + $0x9] sm:$0xff]
        %v328 = vstv %s325
        %v329 = vmul.f32 %v328, %v326
        %v330 = vmul.f32 %v328, %v327
        %v331 = vadd.f32 %v323, %v329
        %v332 = vadd.f32 %v324, %v330
        %s333 = sld [smem:[#allocation3 + $0x8]]
        %v334 = vstv %s333
        %v335 = vmul.f32 %v334, %v326
        %v336 = vmul.f32 %v334, %v327
        %339 = vrot.lane.b32.xlu0 %v335, 127
        %v340 = vpop.permute.xlu0 %339
        %341 = vrot.lane.b32.xlu0 %v336, 127
        %v342 = vpop.permute.xlu0 %341
        %v345 = vadd.f32 %v331, %v340
        %v346 = vadd.f32 %v332, %v342
        %s347 = sld [smem:[#allocation3 + $0x9]]
        %v348 = vstv %s347
        %v349 = vmul.f32 %v348, %v326
        %v350 = vmul.f32 %v348, %v327
        %353 = vrot.lane.b32.xlu0 %v349, 126
        %v354 = vpop.permute.xlu0 %353
        %355 = vrot.lane.b32.xlu0 %v350, 126
        %v356 = vpop.permute.xlu0 %355
        %v359 = vadd.f32 %v345, %v354
        %v360 = vadd.f32 %v346, %v356
        %s361 = sld [smem:[#allocation3 + $0xa]]
        %v362 = vstv %s361
        %v363 = vmul.f32 %v362, %v326
        %v364 = vmul.f32 %v362, %v327
        %367 = vrot.lane.b32.xlu0 %v363, 125
        %v368 = vpop.permute.xlu0 %367
        %369 = vrot.lane.b32.xlu0 %v364, 125
        %v370 = vpop.permute.xlu0 %369
        %v373 = vadd.f32 %v359, %v368
        %v374 = vadd.f32 %v360, %v370
        %s375 = sld [smem:[#allocation3 + $0xb]]
        %v376 = vstv %s375
        %v377 = vmul.f32 %v376, %v326
        %v378 = vmul.f32 %v376, %v327
        %381 = vrot.lane.b32.xlu0 %v377, 124
        %v382 = vpop.permute.xlu0 %381
        %383 = vrot.lane.b32.xlu0 %v378, 124
        %v384 = vpop.permute.xlu0 %383
        %v387 = vadd.f32 %v373, %v382
        %v388 = vadd.f32 %v374, %v384
        %s389 = sld [smem:[#allocation3 + $0xc]]
        %v390 = vstv %s389
        %v391 = vmul.f32 %v390, %v326
        %v392 = vmul.f32 %v390, %v327
        %395 = vrot.lane.b32.xlu0 %v391, 123
        %v396 = vpop.permute.xlu0 %395
        %397 = vrot.lane.b32.xlu0 %v392, 123
        %v398 = vpop.permute.xlu0 %397
        %v401 = vadd.f32 %v387, %v396
        %v402 = vadd.f32 %v388, %v398
        %s403 = sld [smem:[#allocation3 + $0xd]]
        %v404 = vstv %s403
        %v405 = vmul.f32 %v404, %v326
        %v406 = vmul.f32 %v404, %v327
        %409 = vrot.lane.b32.xlu0 %v405, 122
        %v410 = vpop.permute.xlu0 %409
        %411 = vrot.lane.b32.xlu0 %v406, 122
        %v412 = vpop.permute.xlu0 %411
        %v415 = vadd.f32 %v401, %v410
        %v416 = vadd.f32 %v402, %v412
        %s417 = sld [smem:[#allocation3 + $0xe]]
        %v418 = vld [vmem:[#allocation2 + $0x2] sm:$0xff]
        %v419 = vld [vmem:[#allocation2 + $0xa] sm:$0xff]
        %v420 = vstv %s417
        %v421 = vmul.f32 %v420, %v418
        %v422 = vmul.f32 %v420, %v419
        %v423 = vadd.f32 %v415, %v421
        %v424 = vadd.f32 %v416, %v422
        %s425 = sld [smem:[#allocation3 + $0xf]]
        %v426 = vstv %s425
        %v427 = vmul.f32 %v426, %v418
        %v428 = vmul.f32 %v426, %v419
        %431 = vrot.lane.b32.xlu0 %v427, 127
        %v432 = vpop.permute.xlu0 %431
        %433 = vrot.lane.b32.xlu0 %v428, 127
        %v434 = vpop.permute.xlu0 %433
        %v437 = vadd.f32 %v423, %v432
        %v438 = vadd.f32 %v424, %v434
        %s439 = sld [smem:[#allocation3 + $0x10]]
        %v440 = vstv %s439
        %v441 = vmul.f32 %v440, %v418
        %v442 = vmul.f32 %v440, %v419
        %445 = vrot.lane.b32.xlu0 %v441, 126
        %v446 = vpop.permute.xlu0 %445
        %447 = vrot.lane.b32.xlu0 %v442, 126
        %v448 = vpop.permute.xlu0 %447
        %v451 = vadd.f32 %v437, %v446
        %v452 = vadd.f32 %v438, %v448
        %s453 = sld [smem:[#allocation3 + $0x11]]
        %v454 = vstv %s453
        %v455 = vmul.f32 %v454, %v418
        %v456 = vmul.f32 %v454, %v419
        %459 = vrot.lane.b32.xlu0 %v455, 125
        %v460 = vpop.permute.xlu0 %459
        %461 = vrot.lane.b32.xlu0 %v456, 125
        %v462 = vpop.permute.xlu0 %461
        %v465 = vadd.f32 %v451, %v460
        %v466 = vadd.f32 %v452, %v462
        %s467 = sld [smem:[#allocation3 + $0x12]]
        %v468 = vstv %s467
        %v469 = vmul.f32 %v468, %v418
        %v470 = vmul.f32 %v468, %v419
        %473 = vrot.lane.b32.xlu0 %v469, 124
        %v474 = vpop.permute.xlu0 %473
        %475 = vrot.lane.b32.xlu0 %v470, 124
        %v476 = vpop.permute.xlu0 %475
        %v479 = vadd.f32 %v465, %v474
        %v480 = vadd.f32 %v466, %v476
        %s481 = sld [smem:[#allocation3 + $0x13]]
        %v482 = vstv %s481
        %v483 = vmul.f32 %v482, %v418
        %v484 = vmul.f32 %v482, %v419
        %487 = vrot.lane.b32.xlu0 %v483, 123
        %v488 = vpop.permute.xlu0 %487
        %489 = vrot.lane.b32.xlu0 %v484, 123
        %v490 = vpop.permute.xlu0 %489
        %v493 = vadd.f32 %v479, %v488
        %v494 = vadd.f32 %v480, %v490
        %s495 = sld [smem:[#allocation3 + $0x14]]
        %v496 = vstv %s495
        %v497 = vmul.f32 %v496, %v418
        %v498 = vmul.f32 %v496, %v419
        %501 = vrot.lane.b32.xlu0 %v497, 122
        %v502 = vpop.permute.xlu0 %501
        %503 = vrot.lane.b32.xlu0 %v498, 122
        %v504 = vpop.permute.xlu0 %503
        %v507 = vadd.f32 %v493, %v502
        %v508 = vadd.f32 %v494, %v504
        %s509 = sld [smem:[#allocation3 + $0x15]]
        %v510 = vld [vmem:[#allocation2 + $0x3] sm:$0xff]
        %v511 = vld [vmem:[#allocation2 + $0xb] sm:$0xff]
        %v512 = vstv %s509
        %v513 = vmul.f32 %v512, %v510
        %v514 = vmul.f32 %v512, %v511
        %v515 = vadd.f32 %v507, %v513
        %v516 = vadd.f32 %v508, %v514
        %s517 = sld [smem:[#allocation3 + $0x16]]
        %v518 = vstv %s517
        %v519 = vmul.f32 %v518, %v510
        %v520 = vmul.f32 %v518, %v511
        %523 = vrot.lane.b32.xlu0 %v519, 127
        %v524 = vpop.permute.xlu0 %523
        %525 = vrot.lane.b32.xlu0 %v520, 127
        %v526 = vpop.permute.xlu0 %525
        %v529 = vadd.f32 %v515, %v524
        %v530 = vadd.f32 %v516, %v526
        %s531 = sld [smem:[#allocation3 + $0x17]]
        %v532 = vstv %s531
        %v533 = vmul.f32 %v532, %v510
        %v534 = vmul.f32 %v532, %v511
        %537 = vrot.lane.b32.xlu0 %v533, 126
        %v538 = vpop.permute.xlu0 %537
        %539 = vrot.lane.b32.xlu0 %v534, 126
        %v540 = vpop.permute.xlu0 %539
        %v543 = vadd.f32 %v529, %v538
        %v544 = vadd.f32 %v530, %v540
        %s545 = sld [smem:[#allocation3 + $0x18]]
        %v546 = vstv %s545
        %v547 = vmul.f32 %v546, %v510
        %v548 = vmul.f32 %v546, %v511
        %551 = vrot.lane.b32.xlu0 %v547, 125
        %v552 = vpop.permute.xlu0 %551
        %553 = vrot.lane.b32.xlu0 %v548, 125
        %v554 = vpop.permute.xlu0 %553
        %v557 = vadd.f32 %v543, %v552
        %v558 = vadd.f32 %v544, %v554
        %s559 = sld [smem:[#allocation3 + $0x19]]
        %v560 = vstv %s559
        %v561 = vmul.f32 %v560, %v510
        %v562 = vmul.f32 %v560, %v511
        %565 = vrot.lane.b32.xlu0 %v561, 124
        %v566 = vpop.permute.xlu0 %565
        %567 = vrot.lane.b32.xlu0 %v562, 124
        %v568 = vpop.permute.xlu0 %567
        %v571 = vadd.f32 %v557, %v566
        %v572 = vadd.f32 %v558, %v568
        %s573 = sld [smem:[#allocation3 + $0x1a]]
        %v574 = vstv %s573
        %v575 = vmul.f32 %v574, %v510
        %v576 = vmul.f32 %v574, %v511
        %579 = vrot.lane.b32.xlu0 %v575, 123
        %v580 = vpop.permute.xlu0 %579
        %581 = vrot.lane.b32.xlu0 %v576, 123
        %v582 = vpop.permute.xlu0 %581
        %v585 = vadd.f32 %v571, %v580
        %v586 = vadd.f32 %v572, %v582
        %s587 = sld [smem:[#allocation3 + $0x1b]]
        %v588 = vstv %s587
        %v589 = vmul.f32 %v588, %v510
        %v590 = vmul.f32 %v588, %v511
        %593 = vrot.lane.b32.xlu0 %v589, 122
        %v594 = vpop.permute.xlu0 %593
        %595 = vrot.lane.b32.xlu0 %v590, 122
        %v596 = vpop.permute.xlu0 %595
        %v599 = vadd.f32 %v585, %v594
        %v600 = vadd.f32 %v586, %v596
        %s601 = sld [smem:[#allocation3 + $0x1c]]
        %v602 = vld [vmem:[#allocation2 + $0x4] sm:$0xff]
        %v603 = vld [vmem:[#allocation2 + $0xc] sm:$0xff]
        %v604 = vstv %s601
        %v605 = vmul.f32 %v604, %v602
        %v606 = vmul.f32 %v604, %v603
        %v607 = vadd.f32 %v599, %v605
        %v608 = vadd.f32 %v600, %v606
        %s609 = sld [smem:[#allocation3 + $0x1d]]
        %v610 = vstv %s609
        %v611 = vmul.f32 %v610, %v602
        %v612 = vmul.f32 %v610, %v603
        %615 = vrot.lane.b32.xlu0 %v611, 127
        %v616 = vpop.permute.xlu0 %615
        %617 = vrot.lane.b32.xlu0 %v612, 127
        %v618 = vpop.permute.xlu0 %617
        %v621 = vadd.f32 %v607, %v616
        %v622 = vadd.f32 %v608, %v618
        %s623 = sld [smem:[#allocation3 + $0x1e]]
        %v624 = vstv %s623
        %v625 = vmul.f32 %v624, %v602
        %v626 = vmul.f32 %v624, %v603
        %629 = vrot.lane.b32.xlu0 %v625, 126
        %v630 = vpop.permute.xlu0 %629
        %631 = vrot.lane.b32.xlu0 %v626, 126
        %v632 = vpop.permute.xlu0 %631
        %v635 = vadd.f32 %v621, %v630
        %v636 = vadd.f32 %v622, %v632
        %s637 = sld [smem:[#allocation3 + $0x1f]]
        %v638 = vstv %s637
        %v639 = vmul.f32 %v638, %v602
        %v640 = vmul.f32 %v638, %v603
        %643 = vrot.lane.b32.xlu0 %v639, 125
        %v644 = vpop.permute.xlu0 %643
        %645 = vrot.lane.b32.xlu0 %v640, 125
        %v646 = vpop.permute.xlu0 %645
        %v649 = vadd.f32 %v635, %v644
        %v650 = vadd.f32 %v636, %v646
        %s651 = sld [smem:[#allocation3 + $0x20]]
        %v652 = vstv %s651
        %v653 = vmul.f32 %v652, %v602
        %v654 = vmul.f32 %v652, %v603
        %657 = vrot.lane.b32.xlu0 %v653, 124
        %v658 = vpop.permute.xlu0 %657
        %659 = vrot.lane.b32.xlu0 %v654, 124
        %v660 = vpop.permute.xlu0 %659
        %v663 = vadd.f32 %v649, %v658
        %v664 = vadd.f32 %v650, %v660
        %s665 = sld [smem:[#allocation3 + $0x21]]
        %v666 = vstv %s665
        %v667 = vmul.f32 %v666, %v602
        %v668 = vmul.f32 %v666, %v603
        %671 = vrot.lane.b32.xlu0 %v667, 123
        %v672 = vpop.permute.xlu0 %671
        %673 = vrot.lane.b32.xlu0 %v668, 123
        %v674 = vpop.permute.xlu0 %673
        %v677 = vadd.f32 %v663, %v672
        %v678 = vadd.f32 %v664, %v674
        %s679 = sld [smem:[#allocation3 + $0x22]]
        %v680 = vstv %s679
        %v681 = vmul.f32 %v680, %v602
        %v682 = vmul.f32 %v680, %v603
        %685 = vrot.lane.b32.xlu0 %v681, 122
        %v686 = vpop.permute.xlu0 %685
        %687 = vrot.lane.b32.xlu0 %v682, 122
        %v688 = vpop.permute.xlu0 %687
        %v691 = vadd.f32 %v677, %v686
        %v692 = vadd.f32 %v678, %v688
        %s693 = sld [smem:[#allocation3 + $0x23]]
        %v694 = vld [vmem:[#allocation2 + $0x5] sm:$0xff]
        %v695 = vld [vmem:[#allocation2 + $0xd] sm:$0xff]
        %v696 = vstv %s693
        %v697 = vmul.f32 %v696, %v694
        %v698 = vmul.f32 %v696, %v695
        %v699 = vadd.f32 %v691, %v697
        %v700 = vadd.f32 %v692, %v698
        %s701 = sld [smem:[#allocation3 + $0x24]]
        %v702 = vstv %s701
        %v703 = vmul.f32 %v702, %v694
        %v704 = vmul.f32 %v702, %v695
        %707 = vrot.lane.b32.xlu0 %v703, 127
        %v708 = vpop.permute.xlu0 %707
        %709 = vrot.lane.b32.xlu0 %v704, 127
        %v710 = vpop.permute.xlu0 %709
        %v713 = vadd.f32 %v699, %v708
        %v714 = vadd.f32 %v700, %v710
        %s715 = sld [smem:[#allocation3 + $0x25]]
        %v716 = vstv %s715
        %v717 = vmul.f32 %v716, %v694
        %v718 = vmul.f32 %v716, %v695
        %721 = vrot.lane.b32.xlu0 %v717, 126
        %v722 = vpop.permute.xlu0 %721
        %723 = vrot.lane.b32.xlu0 %v718, 126
        %v724 = vpop.permute.xlu0 %723
        %v727 = vadd.f32 %v713, %v722
        %v728 = vadd.f32 %v714, %v724
        %s729 = sld [smem:[#allocation3 + $0x26]]
        %v730 = vstv %s729
        %v731 = vmul.f32 %v730, %v694
        %v732 = vmul.f32 %v730, %v695
        %735 = vrot.lane.b32.xlu0 %v731, 125
        %v736 = vpop.permute.xlu0 %735
        %737 = vrot.lane.b32.xlu0 %v732, 125
        %v738 = vpop.permute.xlu0 %737
        %v741 = vadd.f32 %v727, %v736
        %v742 = vadd.f32 %v728, %v738
        %s743 = sld [smem:[#allocation3 + $0x27]]
        %v744 = vstv %s743
        %v745 = vmul.f32 %v744, %v694
        %v746 = vmul.f32 %v744, %v695
        %749 = vrot.lane.b32.xlu0 %v745, 124
        %v750 = vpop.permute.xlu0 %749
        %751 = vrot.lane.b32.xlu0 %v746, 124
        %v752 = vpop.permute.xlu0 %751
        %v755 = vadd.f32 %v741, %v750
        %v756 = vadd.f32 %v742, %v752
        %s757 = sld [smem:[#allocation3 + $0x28]]
        %v758 = vstv %s757
        %v759 = vmul.f32 %v758, %v694
        %v760 = vmul.f32 %v758, %v695
        %763 = vrot.lane.b32.xlu0 %v759, 123
        %v764 = vpop.permute.xlu0 %763
        %765 = vrot.lane.b32.xlu0 %v760, 123
        %v766 = vpop.permute.xlu0 %765
        %v769 = vadd.f32 %v755, %v764
        %v770 = vadd.f32 %v756, %v766
        %s771 = sld [smem:[#allocation3 + $0x29]]
        %v772 = vstv %s771
        %v773 = vmul.f32 %v772, %v694
        %v774 = vmul.f32 %v772, %v695
        %777 = vrot.lane.b32.xlu0 %v773, 122
        %v778 = vpop.permute.xlu0 %777
        %779 = vrot.lane.b32.xlu0 %v774, 122
        %v780 = vpop.permute.xlu0 %779
        %v783 = vadd.f32 %v769, %v778
        %v784 = vadd.f32 %v770, %v780
        %s785 = sld [smem:[#allocation3 + $0x2a]]
        %v786 = vld [vmem:[#allocation2 + $0x6] sm:$0xff]
        %v787 = vld [vmem:[#allocation2 + $0xe] sm:$0xff]
        %v788 = vstv %s785
        %v789 = vmul.f32 %v788, %v786
        %v790 = vmul.f32 %v788, %v787
        %v791 = vadd.f32 %v783, %v789
        %v792 = vadd.f32 %v784, %v790
        %s793 = sld [smem:[#allocation3 + $0x2b]]
        %v794 = vstv %s793
        %v795 = vmul.f32 %v794, %v786
        %v796 = vmul.f32 %v794, %v787
        %799 = vrot.lane.b32.xlu0 %v795, 127
        %v800 = vpop.permute.xlu0 %799
        %801 = vrot.lane.b32.xlu0 %v796, 127
        %v802 = vpop.permute.xlu0 %801
        %v805 = vadd.f32 %v791, %v800
        %v806 = vadd.f32 %v792, %v802
        %s807 = sld [smem:[#allocation3 + $0x2c]]
        %v808 = vstv %s807
        %v809 = vmul.f32 %v808, %v786
        %v810 = vmul.f32 %v808, %v787
        %813 = vrot.lane.b32.xlu0 %v809, 126
        %v814 = vpop.permute.xlu0 %813
        %815 = vrot.lane.b32.xlu0 %v810, 126
        %v816 = vpop.permute.xlu0 %815
        %v819 = vadd.f32 %v805, %v814
        %v820 = vadd.f32 %v806, %v816
        %s821 = sld [smem:[#allocation3 + $0x2d]]
        %v822 = vstv %s821
        %v823 = vmul.f32 %v822, %v786
        %v824 = vmul.f32 %v822, %v787
        %827 = vrot.lane.b32.xlu0 %v823, 125
        %v828 = vpop.permute.xlu0 %827
        %829 = vrot.lane.b32.xlu0 %v824, 125
        %v830 = vpop.permute.xlu0 %829
        %v833 = vadd.f32 %v819, %v828
        %v834 = vadd.f32 %v820, %v830
        %s835 = sld [smem:[#allocation3 + $0x2e]]
        %v836 = vstv %s835
        %v837 = vmul.f32 %v836, %v786
        %v838 = vmul.f32 %v836, %v787
        %841 = vrot.lane.b32.xlu0 %v837, 124
        %v842 = vpop.permute.xlu0 %841
        %843 = vrot.lane.b32.xlu0 %v838, 124
        %v844 = vpop.permute.xlu0 %843
        %v847 = vadd.f32 %v833, %v842
        %v848 = vadd.f32 %v834, %v844
        %s849 = sld [smem:[#allocation3 + $0x2f]]
        %v850 = vstv %s849
        %v851 = vmul.f32 %v850, %v786
        %v852 = vmul.f32 %v850, %v787
        %855 = vrot.lane.b32.xlu0 %v851, 123
        %v856 = vpop.permute.xlu0 %855
        %857 = vrot.lane.b32.xlu0 %v852, 123
        %v858 = vpop.permute.xlu0 %857
        %v861 = vadd.f32 %v847, %v856
        %v862 = vadd.f32 %v848, %v858
        %s863 = sld [smem:[#allocation3 + $0x30]]
        %v864 = vstv %s863
        %v865 = vmul.f32 %v864, %v786
        %v866 = vmul.f32 %v864, %v787
        %869 = vrot.lane.b32.xlu0 %v865, 122
        %v870 = vpop.permute.xlu0 %869
        %871 = vrot.lane.b32.xlu0 %v866, 122
        %v872 = vpop.permute.xlu0 %871
        %v875 = vadd.f32 %v861, %v870
        %v876 = vadd.f32 %v862, %v872
        %s877 = sld [smem:[#allocation3 + $0x31]]
        %v878 = vld [vmem:[%s230] sm:$0xff]
        %v879 = vld [vmem:[%s230 + $0x8] sm:$0xff]
        %v880 = vstv %s877
        %v881 = vmul.f32 %v880, %v878
        %v882 = vmul.f32 %v880, %v879
        %v883 = vadd.f32 %v875, %v881
        %v884 = vadd.f32 %v876, %v882
        %s885 = sld [smem:[#allocation3 + $0x32]]
        %v886 = vstv %s885
        %v887 = vmul.f32 %v886, %v878
        %v888 = vmul.f32 %v886, %v879
        %891 = vrot.lane.b32.xlu0 %v887, 127
        %v892 = vpop.permute.xlu0 %891
        %893 = vrot.lane.b32.xlu0 %v888, 127
        %v894 = vpop.permute.xlu0 %893
        %v897 = vadd.f32 %v883, %v892
        %v898 = vadd.f32 %v884, %v894
        %s899 = sld [smem:[#allocation3 + $0x33]]
        %v900 = vstv %s899
        %v901 = vmul.f32 %v900, %v878
        %v902 = vmul.f32 %v900, %v879
        %905 = vrot.lane.b32.xlu0 %v901, 126
        %v906 = vpop.permute.xlu0 %905
        %907 = vrot.lane.b32.xlu0 %v902, 126
        %v908 = vpop.permute.xlu0 %907
        %v911 = vadd.f32 %v897, %v906
        %v912 = vadd.f32 %v898, %v908
        %s913 = sld [smem:[#allocation3 + $0x34]]
        %v914 = vstv %s913
        %v915 = vmul.f32 %v914, %v878
        %v916 = vmul.f32 %v914, %v879
        %919 = vrot.lane.b32.xlu0 %v915, 125
        %v920 = vpop.permute.xlu0 %919
        %921 = vrot.lane.b32.xlu0 %v916, 125
        %v922 = vpop.permute.xlu0 %921
        %v925 = vadd.f32 %v911, %v920
        %v926 = vadd.f32 %v912, %v922
        %s927 = sld [smem:[#allocation3 + $0x35]]
        %v928 = vstv %s927
        %v929 = vmul.f32 %v928, %v878
        %v930 = vmul.f32 %v928, %v879
        %933 = vrot.lane.b32.xlu0 %v929, 124
        %v934 = vpop.permute.xlu0 %933
        %935 = vrot.lane.b32.xlu0 %v930, 124
        %v936 = vpop.permute.xlu0 %935
        %v939 = vadd.f32 %v925, %v934
        %v940 = vadd.f32 %v926, %v936
        %s941 = sld [smem:[#allocation3 + $0x36]]
        %v942 = vstv %s941
        %v943 = vmul.f32 %v942, %v878
        %v944 = vmul.f32 %v942, %v879
        %947 = vrot.lane.b32.xlu0 %v943, 123
        %v948 = vpop.permute.xlu0 %947
        %949 = vrot.lane.b32.xlu0 %v944, 123
        %v950 = vpop.permute.xlu0 %949
        %v953 = vadd.f32 %v939, %v948
        %v954 = vadd.f32 %v940, %v950
        %s955 = sld [smem:[#allocation3 + $0x37]]
        %v956 = vstv %s955
        %v957 = vmul.f32 %v956, %v878
        %v958 = vmul.f32 %v956, %v879
        %961 = vrot.lane.b32.xlu0 %v957, 122
        %v962 = vpop.permute.xlu0 %961
        %963 = vrot.lane.b32.xlu0 %v958, 122
        %v964 = vpop.permute.xlu0 %963
        %v967 = vadd.f32 %v953, %v962
        %v968 = vadd.f32 %v954, %v964
        %s969 = sld [smem:[#allocation3 + $0x38]]
        %v970 = vld [vmem:[%s230 + $0x1] sm:$0xff]
        %v971 = vld [vmem:[%s230 + $0x9] sm:$0xff]
        %v972 = vstv %s969
        %v973 = vmul.f32 %v972, %v970
        %v974 = vmul.f32 %v972, %v971
        %v975 = vadd.f32 %v967, %v973
        %v976 = vadd.f32 %v968, %v974
        %s977 = sld [smem:[#allocation3 + $0x39]]
        %v978 = vstv %s977
        %v979 = vmul.f32 %v978, %v970
        %v980 = vmul.f32 %v978, %v971
        %983 = vrot.lane.b32.xlu0 %v979, 127
        %v984 = vpop.permute.xlu0 %983
        %985 = vrot.lane.b32.xlu0 %v980, 127
        %v986 = vpop.permute.xlu0 %985
        %v989 = vadd.f32 %v975, %v984
        %v990 = vadd.f32 %v976, %v986
        %s991 = sld [smem:[#allocation3 + $0x3a]]
        %v992 = vstv %s991
        %v993 = vmul.f32 %v992, %v970
        %v994 = vmul.f32 %v992, %v971
        %997 = vrot.lane.b32.xlu0 %v993, 126
        %v998 = vpop.permute.xlu0 %997
        %999 = vrot.lane.b32.xlu0 %v994, 126
        %v1000 = vpop.permute.xlu0 %999
        %v1003 = vadd.f32 %v989, %v998
        %v1004 = vadd.f32 %v990, %v1000
        %s1005 = sld [smem:[#allocation3 + $0x3b]]
        %v1006 = vstv %s1005
        %v1007 = vmul.f32 %v1006, %v970
        %v1008 = vmul.f32 %v1006, %v971
        %1011 = vrot.lane.b32.xlu0 %v1007, 125
        %v1012 = vpop.permute.xlu0 %1011
        %1013 = vrot.lane.b32.xlu0 %v1008, 125
        %v1014 = vpop.permute.xlu0 %1013
        %v1017 = vadd.f32 %v1003, %v1012
        %v1018 = vadd.f32 %v1004, %v1014
        %s1019 = sld [smem:[#allocation3 + $0x3c]]
        %v1020 = vstv %s1019
        %v1021 = vmul.f32 %v1020, %v970
        %v1022 = vmul.f32 %v1020, %v971
        %1025 = vrot.lane.b32.xlu0 %v1021, 124
        %v1026 = vpop.permute.xlu0 %1025
        %1027 = vrot.lane.b32.xlu0 %v1022, 124
        %v1028 = vpop.permute.xlu0 %1027
        %v1031 = vadd.f32 %v1017, %v1026
        %v1032 = vadd.f32 %v1018, %v1028
        %s1033 = sld [smem:[#allocation3 + $0x3d]]
        %v1034 = vstv %s1033
        %v1035 = vmul.f32 %v1034, %v970
        %v1036 = vmul.f32 %v1034, %v971
        %1039 = vrot.lane.b32.xlu0 %v1035, 123
        %v1040 = vpop.permute.xlu0 %1039
        %1041 = vrot.lane.b32.xlu0 %v1036, 123
        %v1042 = vpop.permute.xlu0 %1041
        %v1045 = vadd.f32 %v1031, %v1040
        %v1046 = vadd.f32 %v1032, %v1042
        %s1047 = sld [smem:[#allocation3 + $0x3e]]
        %v1048 = vstv %s1047
        %v1049 = vmul.f32 %v1048, %v970
        %v1050 = vmul.f32 %v1048, %v971
        %1053 = vrot.lane.b32.xlu0 %v1049, 122
        %v1054 = vpop.permute.xlu0 %1053
        %1055 = vrot.lane.b32.xlu0 %v1050, 122
        %v1056 = vpop.permute.xlu0 %1055
        %v1059 = vadd.f32 %v1045, %v1054
        %v1060 = vadd.f32 %v1046, %v1056
        %s1061 = sld [smem:[#allocation3 + $0x3f]]
        %v1062 = vld [vmem:[%s230 + $0x2] sm:$0xff]
        %v1063 = vld [vmem:[%s230 + $0xa] sm:$0xff]
        %v1064 = vstv %s1061
        %v1065 = vmul.f32 %v1064, %v1062
        %v1066 = vmul.f32 %v1064, %v1063
        %v1067 = vadd.f32 %v1059, %v1065
        %v1068 = vadd.f32 %v1060, %v1066
        %s1069 = sld [smem:[#allocation3 + $0x40]]
        %v1070 = vstv %s1069
        %v1071 = vmul.f32 %v1070, %v1062
        %v1072 = vmul.f32 %v1070, %v1063
        %1075 = vrot.lane.b32.xlu0 %v1071, 127
        %v1076 = vpop.permute.xlu0 %1075
        %1077 = vrot.lane.b32.xlu0 %v1072, 127
        %v1078 = vpop.permute.xlu0 %1077
        %v1081 = vadd.f32 %v1067, %v1076
        %v1082 = vadd.f32 %v1068, %v1078
        %s1083 = sld [smem:[#allocation3 + $0x41]]
        %v1084 = vstv %s1083
        %v1085 = vmul.f32 %v1084, %v1062
        %v1086 = vmul.f32 %v1084, %v1063
        %1089 = vrot.lane.b32.xlu0 %v1085, 126
        %v1090 = vpop.permute.xlu0 %1089
        %1091 = vrot.lane.b32.xlu0 %v1086, 126
        %v1092 = vpop.permute.xlu0 %1091
        %v1095 = vadd.f32 %v1081, %v1090
        %v1096 = vadd.f32 %v1082, %v1092
        %s1097 = sld [smem:[#allocation3 + $0x42]]
        %v1098 = vstv %s1097
        %v1099 = vmul.f32 %v1098, %v1062
        %v1100 = vmul.f32 %v1098, %v1063
        %1103 = vrot.lane.b32.xlu0 %v1099, 125
        %v1104 = vpop.permute.xlu0 %1103
        %1105 = vrot.lane.b32.xlu0 %v1100, 125
        %v1106 = vpop.permute.xlu0 %1105
        %v1109 = vadd.f32 %v1095, %v1104
        %v1110 = vadd.f32 %v1096, %v1106
        %s1111 = sld [smem:[#allocation3 + $0x43]]
        %v1112 = vstv %s1111
        %v1113 = vmul.f32 %v1112, %v1062
        %v1114 = vmul.f32 %v1112, %v1063
        %1117 = vrot.lane.b32.xlu0 %v1113, 124
        %v1118 = vpop.permute.xlu0 %1117
        %1119 = vrot.lane.b32.xlu0 %v1114, 124
        %v1120 = vpop.permute.xlu0 %1119
        %v1123 = vadd.f32 %v1109, %v1118
        %v1124 = vadd.f32 %v1110, %v1120
        %s1125 = sld [smem:[#allocation3 + $0x44]]
        %v1126 = vstv %s1125
        %v1127 = vmul.f32 %v1126, %v1062
        %v1128 = vmul.f32 %v1126, %v1063
        %1131 = vrot.lane.b32.xlu0 %v1127, 123
        %v1132 = vpop.permute.xlu0 %1131
        %1133 = vrot.lane.b32.xlu0 %v1128, 123
        %v1134 = vpop.permute.xlu0 %1133
        %v1137 = vadd.f32 %v1123, %v1132
        %v1138 = vadd.f32 %v1124, %v1134
        %s1139 = sld [smem:[#allocation3 + $0x45]]
        %v1140 = vstv %s1139
        %v1141 = vmul.f32 %v1140, %v1062
        %v1142 = vmul.f32 %v1140, %v1063
        %1145 = vrot.lane.b32.xlu0 %v1141, 122
        %v1146 = vpop.permute.xlu0 %1145
        %1147 = vrot.lane.b32.xlu0 %v1142, 122
        %v1148 = vpop.permute.xlu0 %1147
        %v1151 = vadd.f32 %v1137, %v1146
        %v1152 = vadd.f32 %v1138, %v1148
        %s1153 = sld [smem:[#allocation3 + $0x46]]
        %v1154 = vld [vmem:[%s230 + $0x3] sm:$0xff]
        %v1155 = vld [vmem:[%s230 + $0xb] sm:$0xff]
        %v1156 = vstv %s1153
        %v1157 = vmul.f32 %v1156, %v1154
        %v1158 = vmul.f32 %v1156, %v1155
        %v1159 = vadd.f32 %v1151, %v1157
        %v1160 = vadd.f32 %v1152, %v1158
        %s1161 = sld [smem:[#allocation3 + $0x47]]
        %v1162 = vstv %s1161
        %v1163 = vmul.f32 %v1162, %v1154
        %v1164 = vmul.f32 %v1162, %v1155
        %1167 = vrot.lane.b32.xlu0 %v1163, 127
        %v1168 = vpop.permute.xlu0 %1167
        %1169 = vrot.lane.b32.xlu0 %v1164, 127
        %v1170 = vpop.permute.xlu0 %1169
        %v1173 = vadd.f32 %v1159, %v1168
        %v1174 = vadd.f32 %v1160, %v1170
        %s1175 = sld [smem:[#allocation3 + $0x48]]
        %v1176 = vstv %s1175
        %v1177 = vmul.f32 %v1176, %v1154
        %v1178 = vmul.f32 %v1176, %v1155
        %1181 = vrot.lane.b32.xlu0 %v1177, 126
        %v1182 = vpop.permute.xlu0 %1181
        %1183 = vrot.lane.b32.xlu0 %v1178, 126
        %v1184 = vpop.permute.xlu0 %1183
        %v1187 = vadd.f32 %v1173, %v1182
        %v1188 = vadd.f32 %v1174, %v1184
        %s1189 = sld [smem:[#allocation3 + $0x49]]
        %v1190 = vstv %s1189
        %v1191 = vmul.f32 %v1190, %v1154
        %v1192 = vmul.f32 %v1190, %v1155
        %1195 = vrot.lane.b32.xlu0 %v1191, 125
        %v1196 = vpop.permute.xlu0 %1195
        %1197 = vrot.lane.b32.xlu0 %v1192, 125
        %v1198 = vpop.permute.xlu0 %1197
        %v1201 = vadd.f32 %v1187, %v1196
        %v1202 = vadd.f32 %v1188, %v1198
        %s1203 = sld [smem:[#allocation3 + $0x4a]]
        %v1204 = vstv %s1203
        %v1205 = vmul.f32 %v1204, %v1154
        %v1206 = vmul.f32 %v1204, %v1155
        %1209 = vrot.lane.b32.xlu0 %v1205, 124
        %v1210 = vpop.permute.xlu0 %1209
        %1211 = vrot.lane.b32.xlu0 %v1206, 124
        %v1212 = vpop.permute.xlu0 %1211
        %v1215 = vadd.f32 %v1201, %v1210
        %v1216 = vadd.f32 %v1202, %v1212
        %s1217 = sld [smem:[#allocation3 + $0x4b]]
        %v1218 = vstv %s1217
        %v1219 = vmul.f32 %v1218, %v1154
        %v1220 = vmul.f32 %v1218, %v1155
        %1223 = vrot.lane.b32.xlu0 %v1219, 123
        %v1224 = vpop.permute.xlu0 %1223
        %1225 = vrot.lane.b32.xlu0 %v1220, 123
        %v1226 = vpop.permute.xlu0 %1225
        %v1229 = vadd.f32 %v1215, %v1224
        %v1230 = vadd.f32 %v1216, %v1226
        %s1231 = sld [smem:[#allocation3 + $0x4c]]
        %v1232 = vstv %s1231
        %v1233 = vmul.f32 %v1232, %v1154
        %v1234 = vmul.f32 %v1232, %v1155
        %1237 = vrot.lane.b32.xlu0 %v1233, 122
        %v1238 = vpop.permute.xlu0 %1237
        %1239 = vrot.lane.b32.xlu0 %v1234, 122
        %v1240 = vpop.permute.xlu0 %1239
        %v1243 = vadd.f32 %v1229, %v1238
        %v1244 = vadd.f32 %v1230, %v1240
        %s1245 = sld [smem:[#allocation3 + $0x4d]]
        %v1246 = vld [vmem:[%s230 + $0x4] sm:$0xff]
        %v1247 = vld [vmem:[%s230 + $0xc] sm:$0xff]
        %v1248 = vstv %s1245
        %v1249 = vmul.f32 %v1248, %v1246
        %v1250 = vmul.f32 %v1248, %v1247
        %v1251 = vadd.f32 %v1243, %v1249
        %v1252 = vadd.f32 %v1244, %v1250
        %s1253 = sld [smem:[#allocation3 + $0x4e]]
        %v1254 = vstv %s1253
        %v1255 = vmul.f32 %v1254, %v1246
        %v1256 = vmul.f32 %v1254, %v1247
        %1259 = vrot.lane.b32.xlu0 %v1255, 127
        %v1260 = vpop.permute.xlu0 %1259
        %1261 = vrot.lane.b32.xlu0 %v1256, 127
        %v1262 = vpop.permute.xlu0 %1261
        %v1265 = vadd.f32 %v1251, %v1260
        %v1266 = vadd.f32 %v1252, %v1262
        %s1267 = sld [smem:[#allocation3 + $0x4f]]
        %v1268 = vstv %s1267
        %v1269 = vmul.f32 %v1268, %v1246
        %v1270 = vmul.f32 %v1268, %v1247
        %1273 = vrot.lane.b32.xlu0 %v1269, 126
        %v1274 = vpop.permute.xlu0 %1273
        %1275 = vrot.lane.b32.xlu0 %v1270, 126
        %v1276 = vpop.permute.xlu0 %1275
        %v1279 = vadd.f32 %v1265, %v1274
        %v1280 = vadd.f32 %v1266, %v1276
        %s1281 = sld [smem:[#allocation3 + $0x50]]
        %v1282 = vstv %s1281
        %v1283 = vmul.f32 %v1282, %v1246
        %v1284 = vmul.f32 %v1282, %v1247
        %1287 = vrot.lane.b32.xlu0 %v1283, 125
        %v1288 = vpop.permute.xlu0 %1287
        %1289 = vrot.lane.b32.xlu0 %v1284, 125
        %v1290 = vpop.permute.xlu0 %1289
        %v1293 = vadd.f32 %v1279, %v1288
        %v1294 = vadd.f32 %v1280, %v1290
        %s1295 = sld [smem:[#allocation3 + $0x51]]
        %v1296 = vstv %s1295
        %v1297 = vmul.f32 %v1296, %v1246
        %v1298 = vmul.f32 %v1296, %v1247
        %1301 = vrot.lane.b32.xlu0 %v1297, 124
        %v1302 = vpop.permute.xlu0 %1301
        %1303 = vrot.lane.b32.xlu0 %v1298, 124
        %v1304 = vpop.permute.xlu0 %1303
        %v1307 = vadd.f32 %v1293, %v1302
        %v1308 = vadd.f32 %v1294, %v1304
        %s1309 = sld [smem:[#allocation3 + $0x52]]
        %v1310 = vstv %s1309
        %v1311 = vmul.f32 %v1310, %v1246
        %v1312 = vmul.f32 %v1310, %v1247
        %1315 = vrot.lane.b32.xlu0 %v1311, 123
        %v1316 = vpop.permute.xlu0 %1315
        %1317 = vrot.lane.b32.xlu0 %v1312, 123
        %v1318 = vpop.permute.xlu0 %1317
        %v1321 = vadd.f32 %v1307, %v1316
        %v1322 = vadd.f32 %v1308, %v1318
        %s1323 = sld [smem:[#allocation3 + $0x53]]
        %v1324 = vstv %s1323
        %v1325 = vmul.f32 %v1324, %v1246
        %v1326 = vmul.f32 %v1324, %v1247
        %1329 = vrot.lane.b32.xlu0 %v1325, 122
        %v1330 = vpop.permute.xlu0 %1329
        %1331 = vrot.lane.b32.xlu0 %v1326, 122
        %v1332 = vpop.permute.xlu0 %1331
        %v1335 = vadd.f32 %v1321, %v1330
        %v1336 = vadd.f32 %v1322, %v1332
        %s1337 = sld [smem:[#allocation3 + $0x54]]
        %v1338 = vld [vmem:[%s230 + $0x5] sm:$0xff]
        %v1339 = vld [vmem:[%s230 + $0xd] sm:$0xff]
        %v1340 = vstv %s1337
        %v1341 = vmul.f32 %v1340, %v1338
        %v1342 = vmul.f32 %v1340, %v1339
        %v1343 = vadd.f32 %v1335, %v1341
        %v1344 = vadd.f32 %v1336, %v1342
        %s1345 = sld [smem:[#allocation3 + $0x55]]
        %v1346 = vstv %s1345
        %v1347 = vmul.f32 %v1346, %v1338
        %v1348 = vmul.f32 %v1346, %v1339
        %1351 = vrot.lane.b32.xlu0 %v1347, 127
        %v1352 = vpop.permute.xlu0 %1351
        %1353 = vrot.lane.b32.xlu0 %v1348, 127
        %v1354 = vpop.permute.xlu0 %1353
        %v1357 = vadd.f32 %v1343, %v1352
        %v1358 = vadd.f32 %v1344, %v1354
        %s1359 = sld [smem:[#allocation3 + $0x56]]
        %v1360 = vstv %s1359
        %v1361 = vmul.f32 %v1360, %v1338
        %v1362 = vmul.f32 %v1360, %v1339
        %1365 = vrot.lane.b32.xlu0 %v1361, 126
        %v1366 = vpop.permute.xlu0 %1365
        %1367 = vrot.lane.b32.xlu0 %v1362, 126
        %v1368 = vpop.permute.xlu0 %1367
        %v1371 = vadd.f32 %v1357, %v1366
        %v1372 = vadd.f32 %v1358, %v1368
        %s1373 = sld [smem:[#allocation3 + $0x57]]
        %v1374 = vstv %s1373
        %v1375 = vmul.f32 %v1374, %v1338
        %v1376 = vmul.f32 %v1374, %v1339
        %1379 = vrot.lane.b32.xlu0 %v1375, 125
        %v1380 = vpop.permute.xlu0 %1379
        %1381 = vrot.lane.b32.xlu0 %v1376, 125
        %v1382 = vpop.permute.xlu0 %1381
        %v1385 = vadd.f32 %v1371, %v1380
        %v1386 = vadd.f32 %v1372, %v1382
        %s1387 = sld [smem:[#allocation3 + $0x58]]
        %v1388 = vstv %s1387
        %v1389 = vmul.f32 %v1388, %v1338
        %v1390 = vmul.f32 %v1388, %v1339
        %1393 = vrot.lane.b32.xlu0 %v1389, 124
        %v1394 = vpop.permute.xlu0 %1393
        %1395 = vrot.lane.b32.xlu0 %v1390, 124
        %v1396 = vpop.permute.xlu0 %1395
        %v1399 = vadd.f32 %v1385, %v1394
        %v1400 = vadd.f32 %v1386, %v1396
        %s1401 = sld [smem:[#allocation3 + $0x59]]
        %v1402 = vstv %s1401
        %v1403 = vmul.f32 %v1402, %v1338
        %v1404 = vmul.f32 %v1402, %v1339
        %1407 = vrot.lane.b32.xlu0 %v1403, 123
        %v1408 = vpop.permute.xlu0 %1407
        %1409 = vrot.lane.b32.xlu0 %v1404, 123
        %v1410 = vpop.permute.xlu0 %1409
        %v1413 = vadd.f32 %v1399, %v1408
        %v1414 = vadd.f32 %v1400, %v1410
        %s1415 = sld [smem:[#allocation3 + $0x5a]]
        %v1416 = vstv %s1415
        %v1417 = vmul.f32 %v1416, %v1338
        %v1418 = vmul.f32 %v1416, %v1339
        %1421 = vrot.lane.b32.xlu0 %v1417, 122
        %v1422 = vpop.permute.xlu0 %1421
        %1423 = vrot.lane.b32.xlu0 %v1418, 122
        %v1424 = vpop.permute.xlu0 %1423
        %v1427 = vadd.f32 %v1413, %v1422
        %v1428 = vadd.f32 %v1414, %v1424
        %s1429 = sld [smem:[#allocation3 + $0x5b]]
        %v1430 = vld [vmem:[%s230 + $0x6] sm:$0xff]
        %v1431 = vld [vmem:[%s230 + $0xe] sm:$0xff]
        %v1432 = vstv %s1429
        %v1433 = vmul.f32 %v1432, %v1430
        %v1434 = vmul.f32 %v1432, %v1431
        %v1435 = vadd.f32 %v1427, %v1433
        %v1436 = vadd.f32 %v1428, %v1434
        %s1437 = sld [smem:[#allocation3 + $0x5c]]
        %v1438 = vstv %s1437
        %v1439 = vmul.f32 %v1438, %v1430
        %v1440 = vmul.f32 %v1438, %v1431
        %1443 = vrot.lane.b32.xlu0 %v1439, 127
        %v1444 = vpop.permute.xlu0 %1443
        %1445 = vrot.lane.b32.xlu0 %v1440, 127
        %v1446 = vpop.permute.xlu0 %1445
        %v1449 = vadd.f32 %v1435, %v1444
        %v1450 = vadd.f32 %v1436, %v1446
        %s1451 = sld [smem:[#allocation3 + $0x5d]]
        %v1452 = vstv %s1451
        %v1453 = vmul.f32 %v1452, %v1430
        %v1454 = vmul.f32 %v1452, %v1431
        %1457 = vrot.lane.b32.xlu0 %v1453, 126
        %v1458 = vpop.permute.xlu0 %1457
        %1459 = vrot.lane.b32.xlu0 %v1454, 126
        %v1460 = vpop.permute.xlu0 %1459
        %v1463 = vadd.f32 %v1449, %v1458
        %v1464 = vadd.f32 %v1450, %v1460
        %s1465 = sld [smem:[#allocation3 + $0x5e]]
        %v1466 = vstv %s1465
        %v1467 = vmul.f32 %v1466, %v1430
        %v1468 = vmul.f32 %v1466, %v1431
        %1471 = vrot.lane.b32.xlu0 %v1467, 125
        %v1472 = vpop.permute.xlu0 %1471
        %1473 = vrot.lane.b32.xlu0 %v1468, 125
        %v1474 = vpop.permute.xlu0 %1473
        %v1477 = vadd.f32 %v1463, %v1472
        %v1478 = vadd.f32 %v1464, %v1474
        %s1479 = sld [smem:[#allocation3 + $0x5f]]
        %v1480 = vstv %s1479
        %v1481 = vmul.f32 %v1480, %v1430
        %v1482 = vmul.f32 %v1480, %v1431
        %1485 = vrot.lane.b32.xlu0 %v1481, 124
        %v1486 = vpop.permute.xlu0 %1485
        %1487 = vrot.lane.b32.xlu0 %v1482, 124
        %v1488 = vpop.permute.xlu0 %1487
        %v1491 = vadd.f32 %v1477, %v1486
        %v1492 = vadd.f32 %v1478, %v1488
        %s1493 = sld [smem:[#allocation3 + $0x60]]
        %v1494 = vstv %s1493
        %v1495 = vmul.f32 %v1494, %v1430
        %v1496 = vmul.f32 %v1494, %v1431
        %1499 = vrot.lane.b32.xlu0 %v1495, 123
        %v1500 = vpop.permute.xlu0 %1499
        %1501 = vrot.lane.b32.xlu0 %v1496, 123
        %v1502 = vpop.permute.xlu0 %1501
        %v1505 = vadd.f32 %v1491, %v1500
        %v1506 = vadd.f32 %v1492, %v1502
        %s1507 = sld [smem:[#allocation3 + $0x61]]
        %v1508 = vstv %s1507
        %v1509 = vmul.f32 %v1508, %v1430
        %v1510 = vmul.f32 %v1508, %v1431
        %1513 = vrot.lane.b32.xlu0 %v1509, 122
        %v1514 = vpop.permute.xlu0 %1513
        %1515 = vrot.lane.b32.xlu0 %v1510, 122
        %v1516 = vpop.permute.xlu0 %1515
        %v1519 = vadd.f32 %v1505, %v1514
        %v1520 = vadd.f32 %v1506, %v1516
        %vm1521 = vcmask 130048
        %1522 = vst.msk [vmem:[%s177] sm:$0xff] %vm1521, %v1519
        %1523 = vst.msk [vmem:[%s177 + $0x8] sm:$0xff] %vm1521, %v1520
        %p1524 = scmp.lt.s32.totalorder %s17, 1
        %s1525 = scalar_select %p1524, %s17, 1
        %s1526 = smul.addr %s1525, 2
        %s1527 = smul.addr %s1526, 8
        %s1528 = scalar_lea.vmem %s2, %s1527
        // Predicated region
        $region37: #{spatial_gate_forward.2} parent=27 // pred_check
          %p1529 = pneg %p82
        $region38: #{spatial_gate_forward.2} parent=27 // pred_check_branch
          %1531 = sbr.rel (%p1529) target = $region40
        $region39: #{spatial_gate_forward.2} parent=27 // pred_region
          _
        $region40: #{spatial_gate_forward.2} parent=27 // pred_fallthru
          _
      $region28: #{spatial_gate_forward.2} parent=5 // pred_fallthru
        _
      %p1532 = scmp.le.s32.totalorder 2, %s12
      // Predicated region
      $region41: #{spatial_gate_forward.2} parent=5 // pred_check
        %p1533 = pneg %p1532
      $region42: #{spatial_gate_forward.2} parent=5 // pred_check_branch
        %1535 = sbr.rel (%p1533) target = $region44
      $region43: #{spatial_gate_forward.2} parent=5 // pred_region
        %s1536 = ssub.s32 %s12, 2
        // Predicated region
        $region45: #{spatial_gate_forward.2} parent=43 // pred_check
          %p1537 = pneg %p88
        $region46: #{spatial_gate_forward.2} parent=43 // pred_check_branch
          %1539 = sbr.rel (%p1537) target = $region48
        $region47: #{spatial_gate_forward.2} parent=43 // pred_region
          %p1540 = scmp.lt.s32.totalorder %s18, 1
          %s1541 = scalar_select %p1540, %s18, 1
          %s1542 = smul.addr %s1541, 2
          %s1543 = smul.addr %s1542, 8
          %s1544 = scalar_lea.vmem %s2, %s1543
        $region48: #{spatial_gate_forward.2} parent=43 // pred_fallthru
          _
      $region44: #{spatial_gate_forward.2} parent=5 // pred_fallthru
        _
    $region6: #{spatial_gate_forward.2} parent=1 // loop_footer
      %s16 = sadd.s32 1, %s12
    $region7: #{spatial_gate_forward.2} parent=1 // loop_footer_branch
      %11 = sbr.rel target = $region3
    $region8: #{spatial_gate_forward.2} parent=1 // loop_exit
      _
    %1545 = vsyncpa [#allocation4], 1
    %s1546 = scalar_lea.sflag [#allocation4], 1
    %1547 = vsyncpa %s1546, 1
    %1548 = vsyncpa [#allocation5], 1
    %s1549 = scalar_lea.sflag [#allocation5], 1
    %1550 = vsyncpa %s1549, 1

</llo_original>
